<compile_context>
chip_gen: v5e
topology: v5e:2x2
jax: 0.10.0
libtpu: 0.0.40
codegen_flags: <defaults>
</compile_context>

<pallas_src>
import functools

import jax
import jax.numpy as jnp
from jax import lax
from jax.experimental import pallas as pl
from jax.experimental.pallas import tpu as pltpu


# ----------------------------------------------------------------------------
# Fused Pallas kernel
# ----------------------------------------------------------------------------

def _fused_mpn_kernel(steps, skip, meta,
                      ij_ref, it_ref, x_ref, ea_ref, w_ref, b_ref, out_ref):
    f32 = jnp.float32
    HI = lax.Precision.HIGHEST

    def W(name):
        off, r, c = meta["w"][name]
        return w_ref[off:off + r, 0:c]

    def B(name):
        row, c = meta["b"][name]
        return b_ref[row:row + 1, 0:c]

    def relu(v):
        return jnp.maximum(v, 0.0)

    def mlp(v, prefix, n_layers):
        for li in range(n_layers):
            name = f"{prefix}{li}"
            v = jnp.dot(v, W(name), preferred_element_type=f32) + B(name)
            if li < n_layers - 1:
                v = relu(v)
        return v

    N = x_ref.shape[0]
    E = ea_ref.shape[0]

    # ---- embedding MLPs (intermediates never touch HBM) ----
    nf = mlp(x_ref[...], "ne", meta["n_node"])      # (N, Dn)
    ef = mlp(ea_ref[...], "ee", meta["n_edge"])     # (E, De)
    nf0, ef0 = nf, ef

    # ---- selectors, built once (edge_index is constant across steps) ----
    # stacked gather selector: rows 0..E-1 pick targets i, E..2E-1 pick sources j
    oh_ij = (lax.broadcasted_iota(jnp.int32, (2 * E, N), 1)
             == ij_ref[...]).astype(f32)                          # (2E, N)
    # pre-transposed scatter selector: [n, e] = 1 iff i[e] == n
    oh_iT = (lax.broadcasted_iota(jnp.int32, (N, E), 0)
             == it_ref[...]).astype(f32)                          # (N, E)

    b1 = B("b1")
    b2 = B("b2")
    bn = B("bn")

    if skip:
        # hoisted loop-invariant skip half of the edge/node first layers
        g0 = jnp.dot(oh_ij, nf0, preferred_element_type=f32, precision=HI)
        x_i0 = g0[0:E]
        x_j0 = g0[E:2 * E]
        inv_in = jnp.concatenate([x_i0, x_j0, ef0], axis=1)
        edge_add = jnp.dot(inv_in, W("w1_inv"),
                           preferred_element_type=f32) + b1       # (E, 64)
        node_add = jnp.dot(x_i0, W("wn_inv"),
                           preferred_element_type=f32) + bn       # (E, Dn)
    else:
        edge_add = b1
        node_add = bn

    w1d = W("w1_dyn")
    w2 = W("w2")
    wnd = W("wn_dyn")

    def step(nf, ef):
        # single fused gather matmul for both endpoints
        g = jnp.dot(oh_ij, nf, preferred_element_type=f32, precision=HI)
        x_i = g[0:E]
        x_j = g[E:2 * E]
        # mlp_edge: dynamic-K dot + precomputed invariant bias
        dyn_in = jnp.concatenate([x_i, x_j, ef], axis=1)
        h = relu(jnp.dot(dyn_in, w1d, preferred_element_type=f32) + edge_add)
        new_e = relu(jnp.dot(h, w2, preferred_element_type=f32) + b2)
        # message: mlp_node on dynamic part + precomputed invariant bias
        msg_in = jnp.concatenate([x_i, new_e], axis=1)
        msg = relu(jnp.dot(msg_in, wnd, preferred_element_type=f32) + node_add)
        # aggr='add': scatter-add onto target nodes via pre-transposed selector
        new_nf = jnp.dot(oh_iT, msg, preferred_element_type=f32, precision=HI)
        return new_nf, new_e

    if steps <= 4:
        for _ in range(steps):
            nf, ef = step(nf, ef)
    else:
        nf, ef = lax.fori_loop(0, steps, lambda _, c: step(*c), (nf, ef))

    # ---- classification head ----
    cls_h = ef
    n_cls = meta["n_cls"]
    for li in range(n_cls):
        name = f"cls{li}"
        last = li == n_cls - 1
        if last and meta["cls_last_vec"]:
            # 32 -> 1 layer as VPU multiply + lane reduction (weight packed T)
            cls_h = jnp.sum(cls_h * W(name), axis=1, keepdims=True) + B(name)
        else:
            cls_h = jnp.dot(cls_h, W(name), preferred_element_type=f32) + B(name)
            if not last:
                cls_h = relu(cls_h)

    out_ref[...] = cls_h.astype(out_ref.dtype)


# ----------------------------------------------------------------------------
# Host-side parameter packing (2 buffers instead of ~20 tiny inputs)
# ----------------------------------------------------------------------------

def _pack_params(params, skip, node_dim, edge_dim):
    node_emb = params["node_emb"]
    edge_emb = params["edge_emb"]
    cls_layers = params["cls"]
    (w1, b1), (w2, b2), (wn, bn) = params["mpn"]

    weights = []
    biases = []
    for li, (w, b) in enumerate(node_emb):
        weights.append((f"ne{li}", w))
        biases.append((f"ne{li}", b))
    for li, (w, b) in enumerate(edge_emb):
        weights.append((f"ee{li}", w))
        biases.append((f"ee{li}", b))

    nd, ed = node_dim, edge_dim
    if skip:
        # w1 rows: [x_i0, x_i, x_j0, x_j, ef0, ef]; wn rows: [x_i0, x_i, new_e]
        w1_inv = jnp.concatenate(
            [w1[0:nd], w1[2 * nd:3 * nd], w1[4 * nd:4 * nd + ed]], axis=0)
        w1_dyn = jnp.concatenate(
            [w1[nd:2 * nd], w1[3 * nd:4 * nd], w1[4 * nd + ed:4 * nd + 2 * ed]],
            axis=0)
        weights += [("w1_inv", w1_inv), ("w1_dyn", w1_dyn), ("w2", w2),
                    ("wn_inv", wn[0:nd]), ("wn_dyn", wn[nd:])]
    else:
        weights += [("w1_dyn", w1), ("w2", w2), ("wn_dyn", wn)]
    biases += [("b1", b1), ("b2", b2), ("bn", bn)]

    n_cls = len(cls_layers)
    cls_last_vec = cls_layers[-1][0].shape[1] == 1
    for li, (w, b) in enumerate(cls_layers):
        if li == n_cls - 1 and cls_last_vec:
            weights.append((f"cls{li}", w.T))   # packed transposed: (1, din)
        else:
            weights.append((f"cls{li}", w))
        biases.append((f"cls{li}", b))

    col = max(max(w.shape[1] for _, w in weights),
              max(b.shape[0] for _, b in biases))

    w_meta = {}
    w_blocks = []
    off = 0
    for name, w in weights:
        r, c = w.shape
        rpad = -(-r // 8) * 8              # sublane-align every block
        w_meta[name] = (off, r, c)
        blk = jnp.zeros((rpad, col), jnp.float32).at[:r, :c].set(
            w.astype(jnp.float32))
        w_blocks.append(blk)
        off += rpad
    w_all = jnp.concatenate(w_blocks, axis=0)

    b_meta = {}
    b_rows = []
    for idx, (name, b) in enumerate(biases):
        c = b.shape[0]
        b_meta[name] = (idx, c)
        b_rows.append(jnp.zeros((1, col), jnp.float32).at[0, :c].set(
            b.astype(jnp.float32)))
    b_all = jnp.concatenate(b_rows, axis=0)

    meta = dict(w=w_meta, b=b_meta, n_node=len(node_emb),
                n_edge=len(edge_emb), n_cls=n_cls, cls_last_vec=cls_last_vec)
    return w_all, b_all, meta


# ----------------------------------------------------------------------------
# Wrapper
# ----------------------------------------------------------------------------

def vanilla_mpn_forward(x_in, edge_attr_in, i_idx, j_idx, params, steps, skip,
                        node_dim, edge_dim):
    N = x_in.shape[0]
    E = edge_attr_in.shape[0]
    out_dim = params["cls"][-1][0].shape[1]

    w_all, b_all, meta = _pack_params(params, skip, node_dim, edge_dim)

    # stacked gather indices (targets i then sources j) and transposed targets
    ij_idx = jnp.concatenate([i_idx, j_idx], axis=0).astype(jnp.int32)  # (2E,1)
    i_t = i_idx.reshape(1, E).astype(jnp.int32)                          # (1,E)

    inputs = (ij_idx, i_t, x_in, edge_attr_in, w_all, b_all)

    # ---- advisory cost estimate ----
    def dfl(m, k, n):
        return 2 * m * k * n

    flops = 0
    d = x_in.shape[1]
    for w, _ in params["node_emb"]:
        flops += dfl(N, d, w.shape[1]); d = w.shape[1]
    d = edge_attr_in.shape[1]
    for w, _ in params["edge_emb"]:
        flops += dfl(E, d, w.shape[1]); d = w.shape[1]
    (w1, _), (w2, _), (wn, _) = params["mpn"]
    gather = dfl(2 * E, N, node_dim)
    k_dyn = (2 * node_dim + edge_dim) if skip else w1.shape[0]
    if skip:
        flops += gather + dfl(E, k_dyn, w1.shape[1]) + dfl(E, node_dim, node_dim)
    per_step = (gather + dfl(E, k_dyn, w1.shape[1])
                + dfl(E, w2.shape[0], w2.shape[1])
                + dfl(E, node_dim + edge_dim, node_dim)
                + dfl(N, E, node_dim))
    flops += steps * per_step
    d = edge_dim
    for w, _ in params["cls"]:
        flops += dfl(E, d, w.shape[1]); d = w.shape[1]
    bytes_accessed = (sum(int(a.size) * a.dtype.itemsize for a in inputs)
                      + E * out_dim * 4)

    kernel = functools.partial(_fused_mpn_kernel, steps, skip, meta)
    vspec = pl.BlockSpec(memory_space=pltpu.MemorySpace.VMEM)

    return pl.pallas_call(
        kernel,
        in_specs=[vspec] * len(inputs),
        out_specs=vspec,
        out_shape=jax.ShapeDtypeStruct((E, out_dim), jnp.float32),
        cost_estimate=pl.CostEstimate(flops=int(flops), transcendentals=0,
                                      bytes_accessed=int(bytes_accessed)),
    )(*inputs)


# ----------------------------------------------------------------------------
# Pure-JAX reference (for validation)
# ----------------------------------------------------------------------------

def _mlp_ref(x, layers):
    n = len(layers)
    for li, (w, b) in enumerate(layers):
        x = x @ w + b
        if li < n - 1:
            x = jnp.maximum(x, 0.0)
    return x


def vanilla_mpn_ref(x_in, edge_attr_in, i_idx, j_idx, params, steps, skip,
                    node_dim, edge_dim):
    nf = _mlp_ref(x_in, params["node_emb"])
    ef = _mlp_ref(edge_attr_in, params["edge_emb"])
    nf0, ef0 = nf, ef
    (w1, b1), (w2, b2), (wn, bn) = params["mpn"]
    N = x_in.shape[0]
    i_flat = i_idx[:, 0]
    j_flat = j_idx[:, 0]
    for _ in range(steps):
        if skip:
            nf = jnp.concatenate([nf0, nf], axis=1)
            ef = jnp.concatenate([ef0, ef], axis=1)
        x_i = nf[i_flat]
        x_j = nf[j_flat]
        h = jnp.maximum(jnp.concatenate([x_i, x_j, ef], axis=1) @ w1 + b1, 0.0)
        new_e = jnp.maximum(h @ w2 + b2, 0.0)
        msg = jnp.maximum(jnp.concatenate([x_i, new_e], axis=1) @ wn + bn, 0.0)
        new_x = jnp.zeros((N, node_dim), jnp.float32).at[i_flat].add(msg)
        nf, ef = new_x, new_e
    return _mlp_ref(ef, params["cls"])


# ----------------------------------------------------------------------------
# Deterministic parameter init (PyTorch-like uniform(-1/sqrt(fan_in), ...))
# ----------------------------------------------------------------------------

def init_linear(key, din, dout):
    kw, kb = jax.random.split(key)
    s = 1.0 / float(din) ** 0.5
    w = jax.random.uniform(kw, (din, dout), jnp.float32, -s, s)
    b = jax.random.uniform(kb, (dout,), jnp.float32, -s, s)
    return w, b


def init_mlp(key, din, sizes):
    layers = []
    dims = [din] + list(sizes)
    keys = jax.random.split(key, len(sizes))
    for k, a, b in zip(keys, dims[:-1], dims[1:]):
        layers.append(init_linear(k, a, b))
    return layers


if __name__ == "__main__":
    # ---- small synthetic config (consistent with the module's __init__) ----
    NODE_INPUT_DIM = 16
    EDGE_INPUT_DIM = 24
    NODE_FEATURE_DIM = 32
    EDGE_FEATURE_DIM = 32
    NODE_EMB_SIZES = [64, NODE_FEATURE_DIM]
    EDGE_EMB_SIZES = [64, EDGE_FEATURE_DIM]
    CLASS_SIZES = [64, 32, 1]
    STEPS = 2
    SKIP = True          # use_skip_connections
    # AGGR = 'add'

    node_factor = 2 if SKIP else 1
    edge_factor = 2 if SKIP else 1

    N = 8      # nodes
    E = 16     # edges

    key = jax.random.PRNGKey(0)
    k_ne, k_ee, k_cl, k_e1, k_e2, k_nn, k_x, k_ea, k_i, k_j = jax.random.split(key, 10)

    params = {
        "node_emb": init_mlp(k_ne, NODE_INPUT_DIM, NODE_EMB_SIZES),
        "edge_emb": init_mlp(k_ee, EDGE_INPUT_DIM, EDGE_EMB_SIZES),
        "cls": init_mlp(k_cl, EDGE_FEATURE_DIM, CLASS_SIZES),
        "mpn": (
            init_linear(k_e1,
                        NODE_FEATURE_DIM * 2 * node_factor
                        + EDGE_FEATURE_DIM * edge_factor, 64),      # mlp_edge L1
            init_linear(k_e2, 64, EDGE_FEATURE_DIM),                # mlp_edge L2
            init_linear(k_nn,
                        NODE_FEATURE_DIM * node_factor
                        + EDGE_FEATURE_DIM, NODE_FEATURE_DIM),      # mlp_node
        ),
    }

    x = jax.random.normal(k_x, (N, NODE_INPUT_DIM), jnp.float32)
    edge_attr = jax.random.normal(k_ea, (E, EDGE_INPUT_DIM), jnp.float32)
    j_idx = jax.random.randint(k_j, (E, 1), 0, N, jnp.int32)   # source (edge_index[0])
    i_idx = jax.random.randint(k_i, (E, 1), 0, N, jnp.int32)   # target (edge_index[1])

    out = vanilla_mpn_forward(x, edge_attr, i_idx, j_idx, params, STEPS, SKIP,
                              NODE_FEATURE_DIM, EDGE_FEATURE_DIM)
    out = jax.block_until_ready(out)

    ref = vanilla_mpn_ref(x, edge_attr, i_idx, j_idx, params, STEPS, SKIP,
                          NODE_FEATURE_DIM, EDGE_FEATURE_DIM)
    assert out.shape == (E, 1), out.shape
    assert jnp.allclose(out, ref, atol=1e-4, rtol=1e-4), \
        float(jnp.max(jnp.abs(out - ref)))

    print("KERNEL_OK")
</pallas_src>

<mosaic_0001>
module attributes {stable_mosaic.version = 11 : i64} {
  func.func @_fused_mpn_kernel(%arg0: memref<32x1xi32, #tpu.memory_space<vmem>>, %arg1: memref<1x16xi32, #tpu.memory_space<vmem>>, %arg2: memref<8x16xf32, #tpu.memory_space<vmem>>, %arg3: memref<16x24xf32, #tpu.memory_space<vmem>>, %arg4: memref<624x64xf32, #tpu.memory_space<vmem>>, %arg5: memref<10x64xf32, #tpu.memory_space<vmem>>, %arg6: memref<16x1xf32, #tpu.memory_space<vmem>>) attributes {dimension_semantics = [], scalar_prefetch = 0 : i64, scratch_operands = 0 : i64, tpu.core_type = #tpu.core_type<tc>} {
    %c0 = arith.constant 0 : index
    %c0_0 = arith.constant 0 : index
    %0 = vector.load %arg2[%c0, %c0_0] : memref<8x16xf32, #tpu.memory_space<vmem>>, vector<8x16xf32>
    %c0_1 = arith.constant 0 : index
    %c0_2 = arith.constant 0 : index
    %1 = vector.load %arg4[%c0_1, %c0_2] : memref<624x64xf32, #tpu.memory_space<vmem>>, vector<16x64xf32>
    %cst = arith.constant dense<0.000000e+00> : vector<8x64xf32>
    %2 = tpu.matmul %0, %1, %cst {dimension_numbers = #tpu.dot_dimension_numbers<[1], [0], [0], [1], [0, 0, 1, 1], [], []>} : vector<8x16xf32>, vector<16x64xf32>, vector<8x64xf32> -> vector<8x64xf32>
    %c0_3 = arith.constant 0 : index
    %c0_4 = arith.constant 0 : index
    %3 = vector.load %arg5[%c0_3, %c0_4] : memref<10x64xf32, #tpu.memory_space<vmem>>, vector<1x64xf32>
    %4 = vector.broadcast %3 : vector<1x64xf32> to vector<8x64xf32>
    %5 = arith.addf %2, %4 : vector<8x64xf32>
    %cst_5 = arith.constant 0.000000e+00 : f32
    %6 = vector.broadcast %cst_5 : f32 to vector<8x64xf32>
    %7 = arith.maximumf %5, %6 : vector<8x64xf32>
    %c16 = arith.constant 16 : index
    %c0_6 = arith.constant 0 : index
    %8 = vector.load %arg4[%c16, %c0_6] : memref<624x64xf32, #tpu.memory_space<vmem>>, vector<64x32xf32>
    %cst_7 = arith.constant dense<0.000000e+00> : vector<8x32xf32>
    %9 = tpu.matmul %7, %8, %cst_7 {dimension_numbers = #tpu.dot_dimension_numbers<[1], [0], [0], [1], [0, 0, 1, 1], [], []>} : vector<8x64xf32>, vector<64x32xf32>, vector<8x32xf32> -> vector<8x32xf32>
    %c1 = arith.constant 1 : index
    %c0_8 = arith.constant 0 : index
    %10 = vector.load %arg5[%c1, %c0_8] : memref<10x64xf32, #tpu.memory_space<vmem>>, vector<1x32xf32>
    %11 = vector.broadcast %10 : vector<1x32xf32> to vector<8x32xf32>
    %12 = arith.addf %9, %11 : vector<8x32xf32>
    %c0_9 = arith.constant 0 : index
    %c0_10 = arith.constant 0 : index
    %13 = vector.load %arg3[%c0_9, %c0_10] : memref<16x24xf32, #tpu.memory_space<vmem>>, vector<16x24xf32>
    %c80 = arith.constant 80 : index
    %c0_11 = arith.constant 0 : index
    %14 = vector.load %arg4[%c80, %c0_11] : memref<624x64xf32, #tpu.memory_space<vmem>>, vector<24x64xf32>
    %cst_12 = arith.constant dense<0.000000e+00> : vector<16x64xf32>
    %15 = tpu.matmul %13, %14, %cst_12 {dimension_numbers = #tpu.dot_dimension_numbers<[1], [0], [0], [1], [0, 0, 1, 1], [], []>} : vector<16x24xf32>, vector<24x64xf32>, vector<16x64xf32> -> vector<16x64xf32>
    %c2 = arith.constant 2 : index
    %c0_13 = arith.constant 0 : index
    %16 = vector.load %arg5[%c2, %c0_13] : memref<10x64xf32, #tpu.memory_space<vmem>>, vector<1x64xf32>
    %17 = vector.broadcast %16 : vector<1x64xf32> to vector<16x64xf32>
    %18 = arith.addf %15, %17 : vector<16x64xf32>
    %cst_14 = arith.constant 0.000000e+00 : f32
    %19 = vector.broadcast %cst_14 : f32 to vector<16x64xf32>
    %20 = arith.maximumf %18, %19 : vector<16x64xf32>
    %c104 = arith.constant 104 : index
    %c0_15 = arith.constant 0 : index
    %21 = vector.load %arg4[%c104, %c0_15] : memref<624x64xf32, #tpu.memory_space<vmem>>, vector<64x32xf32>
    %cst_16 = arith.constant dense<0.000000e+00> : vector<16x32xf32>
    %22 = tpu.matmul %20, %21, %cst_16 {dimension_numbers = #tpu.dot_dimension_numbers<[1], [0], [0], [1], [0, 0, 1, 1], [], []>} : vector<16x64xf32>, vector<64x32xf32>, vector<16x32xf32> -> vector<16x32xf32>
    %c3 = arith.constant 3 : index
    %c0_17 = arith.constant 0 : index
    %23 = vector.load %arg5[%c3, %c0_17] : memref<10x64xf32, #tpu.memory_space<vmem>>, vector<1x32xf32>
    %24 = vector.broadcast %23 : vector<1x32xf32> to vector<16x32xf32>
    %25 = arith.addf %22, %24 : vector<16x32xf32>
    %26 = tpu.iota {dimensions = array<i32: 1>} : vector<32x8xi32>
    %c0_18 = arith.constant 0 : index
    %c0_19 = arith.constant 0 : index
    %27 = vector.load %arg0[%c0_18, %c0_19] : memref<32x1xi32, #tpu.memory_space<vmem>>, vector<32x1xi32>
    %28 = vector.broadcast %27 : vector<32x1xi32> to vector<32x8xi32>
    %29 = arith.cmpi eq, %26, %28 : vector<32x8xi32>
    %30 = arith.extui %29 : vector<32x8xi1> to vector<32x8xi32>
    %31 = arith.sitofp %30 : vector<32x8xi32> to vector<32x8xf32>
    %32 = tpu.iota {dimensions = array<i32: 0>} : vector<8x16xi32>
    %c0_20 = arith.constant 0 : index
    %c0_21 = arith.constant 0 : index
    %33 = vector.load %arg1[%c0_20, %c0_21] : memref<1x16xi32, #tpu.memory_space<vmem>>, vector<1x16xi32>
    %34 = vector.broadcast %33 : vector<1x16xi32> to vector<8x16xi32>
    %35 = arith.cmpi eq, %32, %34 : vector<8x16xi32>
    %36 = arith.extui %35 : vector<8x16xi1> to vector<8x16xi32>
    %37 = arith.sitofp %36 : vector<8x16xi32> to vector<8x16xf32>
    %c4 = arith.constant 4 : index
    %c0_22 = arith.constant 0 : index
    %38 = vector.load %arg5[%c4, %c0_22] : memref<10x64xf32, #tpu.memory_space<vmem>>, vector<1x64xf32>
    %c5 = arith.constant 5 : index
    %c0_23 = arith.constant 0 : index
    %39 = vector.load %arg5[%c5, %c0_23] : memref<10x64xf32, #tpu.memory_space<vmem>>, vector<1x32xf32>
    %c6 = arith.constant 6 : index
    %c0_24 = arith.constant 0 : index
    %40 = vector.load %arg5[%c6, %c0_24] : memref<10x64xf32, #tpu.memory_space<vmem>>, vector<1x32xf32>
    %cst_25 = arith.constant dense<0.000000e+00> : vector<32x32xf32>
    %41 = tpu.matmul %31, %12, %cst_25 {dimension_numbers = #tpu.dot_dimension_numbers<[1], [0], [0], [1], [0, 0, 1, 1], [], []>, precision = #tpu.contract_precision<fp32>} : vector<32x8xf32>, vector<8x32xf32>, vector<32x32xf32> -> vector<32x32xf32>
    %42 = vector.extract_strided_slice %41 {offsets = [0, 0], sizes = [16, 32], strides = [1, 1]} : vector<32x32xf32> to vector<16x32xf32>
    %43 = vector.extract_strided_slice %41 {offsets = [16, 0], sizes = [16, 32], strides = [1, 1]} : vector<32x32xf32> to vector<16x32xf32>
    %44 = tpu.concatenate %42, %43, %25 in 1 : vector<16x32xf32>, vector<16x32xf32>, vector<16x32xf32> -> vector<16x96xf32>
    %c168 = arith.constant 168 : index
    %c0_26 = arith.constant 0 : index
    %45 = vector.load %arg4[%c168, %c0_26] : memref<624x64xf32, #tpu.memory_space<vmem>>, vector<96x64xf32>
    %cst_27 = arith.constant dense<0.000000e+00> : vector<16x64xf32>
    %46 = tpu.matmul %44, %45, %cst_27 {dimension_numbers = #tpu.dot_dimension_numbers<[1], [0], [0], [1], [0, 0, 1, 1], [], []>} : vector<16x96xf32>, vector<96x64xf32>, vector<16x64xf32> -> vector<16x64xf32>
    %47 = vector.broadcast %38 : vector<1x64xf32> to vector<16x64xf32>
    %48 = arith.addf %46, %47 : vector<16x64xf32>
    %c424 = arith.constant 424 : index
    %c0_28 = arith.constant 0 : index
    %49 = vector.load %arg4[%c424, %c0_28] : memref<624x64xf32, #tpu.memory_space<vmem>>, vector<32x32xf32>
    %cst_29 = arith.constant dense<0.000000e+00> : vector<16x32xf32>
    %50 = tpu.matmul %42, %49, %cst_29 {dimension_numbers = #tpu.dot_dimension_numbers<[1], [0], [0], [1], [0, 0, 1, 1], [], []>} : vector<16x32xf32>, vector<32x32xf32>, vector<16x32xf32> -> vector<16x32xf32>
    %51 = vector.broadcast %40 : vector<1x32xf32> to vector<16x32xf32>
    %52 = arith.addf %50, %51 : vector<16x32xf32>
    %c264 = arith.constant 264 : index
    %c0_30 = arith.constant 0 : index
    %53 = vector.load %arg4[%c264, %c0_30] : memref<624x64xf32, #tpu.memory_space<vmem>>, vector<96x64xf32>
    %c360 = arith.constant 360 : index
    %c0_31 = arith.constant 0 : index
    %54 = vector.load %arg4[%c360, %c0_31] : memref<624x64xf32, #tpu.memory_space<vmem>>, vector<64x32xf32>
    %c456 = arith.constant 456 : index
    %c0_32 = arith.constant 0 : index
    %55 = vector.load %arg4[%c456, %c0_32] : memref<624x64xf32, #tpu.memory_space<vmem>>, vector<64x32xf32>
    %cst_33 = arith.constant dense<0.000000e+00> : vector<32x32xf32>
    %56 = tpu.matmul %31, %12, %cst_33 {dimension_numbers = #tpu.dot_dimension_numbers<[1], [0], [0], [1], [0, 0, 1, 1], [], []>, precision = #tpu.contract_precision<fp32>} : vector<32x8xf32>, vector<8x32xf32>, vector<32x32xf32> -> vector<32x32xf32>
    %57 = vector.extract_strided_slice %56 {offsets = [0, 0], sizes = [16, 32], strides = [1, 1]} : vector<32x32xf32> to vector<16x32xf32>
    %58 = vector.extract_strided_slice %56 {offsets = [16, 0], sizes = [16, 32], strides = [1, 1]} : vector<32x32xf32> to vector<16x32xf32>
    %59 = tpu.concatenate %57, %58, %25 in 1 : vector<16x32xf32>, vector<16x32xf32>, vector<16x32xf32> -> vector<16x96xf32>
    %cst_34 = arith.constant dense<0.000000e+00> : vector<16x64xf32>
    %60 = tpu.matmul %59, %53, %cst_34 {dimension_numbers = #tpu.dot_dimension_numbers<[1], [0], [0], [1], [0, 0, 1, 1], [], []>} : vector<16x96xf32>, vector<96x64xf32>, vector<16x64xf32> -> vector<16x64xf32>
    %61 = arith.addf %60, %48 : vector<16x64xf32>
    %cst_35 = arith.constant 0.000000e+00 : f32
    %62 = vector.broadcast %cst_35 : f32 to vector<16x64xf32>
    %63 = arith.maximumf %61, %62 : vector<16x64xf32>
    %cst_36 = arith.constant dense<0.000000e+00> : vector<16x32xf32>
    %64 = tpu.matmul %63, %54, %cst_36 {dimension_numbers = #tpu.dot_dimension_numbers<[1], [0], [0], [1], [0, 0, 1, 1], [], []>} : vector<16x64xf32>, vector<64x32xf32>, vector<16x32xf32> -> vector<16x32xf32>
    %65 = vector.broadcast %39 : vector<1x32xf32> to vector<16x32xf32>
    %66 = arith.addf %64, %65 : vector<16x32xf32>
    %cst_37 = arith.constant 0.000000e+00 : f32
    %67 = vector.broadcast %cst_37 : f32 to vector<16x32xf32>
    %68 = arith.maximumf %66, %67 : vector<16x32xf32>
    %69 = tpu.concatenate %57, %68 in 1 : vector<16x32xf32>, vector<16x32xf32> -> vector<16x64xf32>
    %cst_38 = arith.constant dense<0.000000e+00> : vector<16x32xf32>
    %70 = tpu.matmul %69, %55, %cst_38 {dimension_numbers = #tpu.dot_dimension_numbers<[1], [0], [0], [1], [0, 0, 1, 1], [], []>} : vector<16x64xf32>, vector<64x32xf32>, vector<16x32xf32> -> vector<16x32xf32>
    %71 = arith.addf %70, %52 : vector<16x32xf32>
    %cst_39 = arith.constant 0.000000e+00 : f32
    %72 = vector.broadcast %cst_39 : f32 to vector<16x32xf32>
    %73 = arith.maximumf %71, %72 : vector<16x32xf32>
    %cst_40 = arith.constant dense<0.000000e+00> : vector<8x32xf32>
    %74 = tpu.matmul %37, %73, %cst_40 {dimension_numbers = #tpu.dot_dimension_numbers<[1], [0], [0], [1], [0, 0, 1, 1], [], []>, precision = #tpu.contract_precision<fp32>} : vector<8x16xf32>, vector<16x32xf32>, vector<8x32xf32> -> vector<8x32xf32>
    %cst_41 = arith.constant dense<0.000000e+00> : vector<32x32xf32>
    %75 = tpu.matmul %31, %74, %cst_41 {dimension_numbers = #tpu.dot_dimension_numbers<[1], [0], [0], [1], [0, 0, 1, 1], [], []>, precision = #tpu.contract_precision<fp32>} : vector<32x8xf32>, vector<8x32xf32>, vector<32x32xf32> -> vector<32x32xf32>
    %76 = vector.extract_strided_slice %75 {offsets = [0, 0], sizes = [16, 32], strides = [1, 1]} : vector<32x32xf32> to vector<16x32xf32>
    %77 = vector.extract_strided_slice %75 {offsets = [16, 0], sizes = [16, 32], strides = [1, 1]} : vector<32x32xf32> to vector<16x32xf32>
    %78 = tpu.concatenate %76, %77, %68 in 1 : vector<16x32xf32>, vector<16x32xf32>, vector<16x32xf32> -> vector<16x96xf32>
    %cst_42 = arith.constant dense<0.000000e+00> : vector<16x64xf32>
    %79 = tpu.matmul %78, %53, %cst_42 {dimension_numbers = #tpu.dot_dimension_numbers<[1], [0], [0], [1], [0, 0, 1, 1], [], []>} : vector<16x96xf32>, vector<96x64xf32>, vector<16x64xf32> -> vector<16x64xf32>
    %80 = arith.addf %79, %48 : vector<16x64xf32>
    %cst_43 = arith.constant 0.000000e+00 : f32
    %81 = vector.broadcast %cst_43 : f32 to vector<16x64xf32>
    %82 = arith.maximumf %80, %81 : vector<16x64xf32>
    %cst_44 = arith.constant dense<0.000000e+00> : vector<16x32xf32>
    %83 = tpu.matmul %82, %54, %cst_44 {dimension_numbers = #tpu.dot_dimension_numbers<[1], [0], [0], [1], [0, 0, 1, 1], [], []>} : vector<16x64xf32>, vector<64x32xf32>, vector<16x32xf32> -> vector<16x32xf32>
    %84 = vector.broadcast %39 : vector<1x32xf32> to vector<16x32xf32>
    %85 = arith.addf %83, %84 : vector<16x32xf32>
    %cst_45 = arith.constant 0.000000e+00 : f32
    %86 = vector.broadcast %cst_45 : f32 to vector<16x32xf32>
    %87 = arith.maximumf %85, %86 : vector<16x32xf32>
    %c520 = arith.constant 520 : index
    %c0_46 = arith.constant 0 : index
    %88 = vector.load %arg4[%c520, %c0_46] : memref<624x64xf32, #tpu.memory_space<vmem>>, vector<32x64xf32>
    %cst_47 = arith.constant dense<0.000000e+00> : vector<16x64xf32>
    %89 = tpu.matmul %87, %88, %cst_47 {dimension_numbers = #tpu.dot_dimension_numbers<[1], [0], [0], [1], [0, 0, 1, 1], [], []>} : vector<16x32xf32>, vector<32x64xf32>, vector<16x64xf32> -> vector<16x64xf32>
    %c7 = arith.constant 7 : index
    %c0_48 = arith.constant 0 : index
    %90 = vector.load %arg5[%c7, %c0_48] : memref<10x64xf32, #tpu.memory_space<vmem>>, vector<1x64xf32>
    %91 = vector.broadcast %90 : vector<1x64xf32> to vector<16x64xf32>
    %92 = arith.addf %89, %91 : vector<16x64xf32>
    %cst_49 = arith.constant 0.000000e+00 : f32
    %93 = vector.broadcast %cst_49 : f32 to vector<16x64xf32>
    %94 = arith.maximumf %92, %93 : vector<16x64xf32>
    %c552 = arith.constant 552 : index
    %c0_50 = arith.constant 0 : index
    %95 = vector.load %arg4[%c552, %c0_50] : memref<624x64xf32, #tpu.memory_space<vmem>>, vector<64x32xf32>
    %cst_51 = arith.constant dense<0.000000e+00> : vector<16x32xf32>
    %96 = tpu.matmul %94, %95, %cst_51 {dimension_numbers = #tpu.dot_dimension_numbers<[1], [0], [0], [1], [0, 0, 1, 1], [], []>} : vector<16x64xf32>, vector<64x32xf32>, vector<16x32xf32> -> vector<16x32xf32>
    %c8 = arith.constant 8 : index
    %c0_52 = arith.constant 0 : index
    %97 = vector.load %arg5[%c8, %c0_52] : memref<10x64xf32, #tpu.memory_space<vmem>>, vector<1x32xf32>
    %98 = vector.broadcast %97 : vector<1x32xf32> to vector<16x32xf32>
    %99 = arith.addf %96, %98 : vector<16x32xf32>
    %cst_53 = arith.constant 0.000000e+00 : f32
    %100 = vector.broadcast %cst_53 : f32 to vector<16x32xf32>
    %101 = arith.maximumf %99, %100 : vector<16x32xf32>
    %c616 = arith.constant 616 : index
    %c0_54 = arith.constant 0 : index
    %102 = vector.load %arg4[%c616, %c0_54] : memref<624x64xf32, #tpu.memory_space<vmem>>, vector<1x32xf32>
    %103 = vector.broadcast %102 : vector<1x32xf32> to vector<16x32xf32>
    %104 = arith.mulf %101, %103 : vector<16x32xf32>
    %cst_55 = arith.constant dense<0.000000e+00> : vector<16xf32>
    %105 = vector.multi_reduction <add>, %104, %cst_55 [1] : vector<16x32xf32> to vector<16xf32>
    %106 = vector.shape_cast %105 : vector<16xf32> to vector<16x1xf32>
    %c9 = arith.constant 9 : index
    %c0_56 = arith.constant 0 : index
    %107 = vector.load %arg5[%c9, %c0_56] : memref<10x64xf32, #tpu.memory_space<vmem>>, vector<1x1xf32>
    %108 = vector.broadcast %107 : vector<1x1xf32> to vector<16x1xf32>
    %109 = arith.addf %106, %108 : vector<16x1xf32>
    %c0_57 = arith.constant 0 : index
    %c0_58 = arith.constant 0 : index
    %110 = vector.load %arg6[%c0_57, %c0_58] : memref<16x1xf32, #tpu.memory_space<vmem>>, vector<16x1xf32>
    tpu.vector_store %arg6[%c0_57, %c0_58], %109 {strides = array<i32>} : memref<16x1xf32, #tpu.memory_space<vmem>>, vector<16x1xf32>,
    return
  }
}

</mosaic_0001>

<llo_original>
// kernel: tpu_custom_call.1
$region0: #{tpu_custom_call.1}
  #allocation0 [shape = 'u32[]', space=smem, size = 0x4, offset = 0x4, fixed_abs, tag = 'smem constant byte address 0x4 - core index']
  #allocation1 [shape = 'u32[72,128]{1,0:T(1,128)}', space=vmem, size = 0x9000, scoped, tag = 'internal scratch']
  %s0 = inlined_call_operand.vmem [shape: s32[32,1], index: 0, kind: input, shape index: {}]
  %s1 = inlined_call_operand.vmem [shape: s32[1,16], index: 1, kind: input, shape index: {}]
  %s2 = inlined_call_operand.vmem [shape: f32[8,16], index: 2, kind: input, shape index: {}]
  %s3 = inlined_call_operand.vmem [shape: f32[16,24], index: 3, kind: input, shape index: {}]
  %s4 = inlined_call_operand.vmem [shape: f32[624,64], index: 4, kind: input, shape index: {}]
  %s5 = inlined_call_operand.vmem [shape: f32[10,64], index: 5, kind: input, shape index: {}]
  %s6 = inlined_call_operand.vmem [shape: f32[16,1], index: 6, kind: output, shape index: {}]
  %s7 = sld [smem:[#allocation0]]
  $region34: #{tpu_custom_call.1} parent=0
    _
  %s9 = ssub.s32 1, %s7
  %s10 = scalar_select 0, %s9, %s7
  // Predicated region
  $region2: #{tpu_custom_call.1} parent=0 // pred_check
    _
  $region3: #{tpu_custom_call.1} parent=0 // pred_check_branch
    %12 = sbr.rel (0) target = $region5
  $region4: #{tpu_custom_call.1} parent=0 // pred_region
    _
  $region5: #{tpu_custom_call.1} parent=0 // pred_fallthru
    _
  // Predicated region
  $region6: #{tpu_custom_call.1} parent=0 // pred_check
    _
  $region7: #{tpu_custom_call.1} parent=0 // pred_check_branch
    %14 = sbr.rel (0) target = $region9
  $region8: #{tpu_custom_call.1} parent=0 // pred_region
    _
  $region9: #{tpu_custom_call.1} parent=0 // pred_fallthru
    _
  // Predicated region
  $region10: #{tpu_custom_call.1} parent=0 // pred_check
    _
  $region11: #{tpu_custom_call.1} parent=0 // pred_check_branch
    %16 = sbr.rel (0) target = $region13
  $region12: #{tpu_custom_call.1} parent=0 // pred_region
    _
  $region13: #{tpu_custom_call.1} parent=0 // pred_fallthru
    _
  // Predicated region
  $region14: #{tpu_custom_call.1} parent=0 // pred_check
    _
  $region15: #{tpu_custom_call.1} parent=0 // pred_check_branch
    %18 = sbr.rel (0) target = $region17
  $region16: #{tpu_custom_call.1} parent=0 // pred_region
    _
  $region17: #{tpu_custom_call.1} parent=0 // pred_fallthru
    _
  // Predicated region
  $region18: #{tpu_custom_call.1} parent=0 // pred_check
    _
  $region19: #{tpu_custom_call.1} parent=0 // pred_check_branch
    %20 = sbr.rel (0) target = $region21
  $region20: #{tpu_custom_call.1} parent=0 // pred_region
    _
  $region21: #{tpu_custom_call.1} parent=0 // pred_fallthru
    _
  // Predicated region
  $region22: #{tpu_custom_call.1} parent=0 // pred_check
    _
  $region23: #{tpu_custom_call.1} parent=0 // pred_check_branch
    %22 = sbr.rel (0) target = $region25
  $region24: #{tpu_custom_call.1} parent=0 // pred_region
    _
  $region25: #{tpu_custom_call.1} parent=0 // pred_fallthru
    _
  %v23 = vld [vmem:[%s2] sm:$0xff]
  %v24 = vld [vmem:[%s4] sm:$0xff]
  %v25 = vld [vmem:[%s4 + $0x8] sm:$0xff]
  %v26 = vld [vmem:[%s5] sm:$0x1]
  %v27 = vperm.slane %v26, 0
  %vm28 = vcmask 130048
  %v30 = vsel %vm28, %v23, 0
  %32 = vmatpush.msra.mxu0 0.0
  %33 = vmatpush.msra.mxu0 0.0
  %34 = vmatpush.msra.mxu0 0.0
  %35 = vmatpush.msra.mxu0 0.0
  %36 = vmatpush.msra.mxu0 0.0
  %37 = vmatpush.msra.mxu0 0.0
  %38 = vmatpush.msra.mxu0 0.0
  %39 = vmatpush.msra.mxu0 0.0
  %40 = vmatpush.msra.mxu0 0.0
  %41 = vmatpush.msra.mxu0 0.0
  %42 = vmatpush.msra.mxu0 0.0
  %43 = vmatpush.msra.mxu0 0.0
  %44 = vmatpush.msra.mxu0 0.0
  %45 = vmatpush.msra.mxu0 0.0
  %46 = vmatpush.msra.mxu0 %v25
  %47 = vmatpush.msra.mxu0 %v24
  %48 = vmatmul.f32.gmra.mxu0 %v30
  %v49 = vpop.f32.mrf.mxu0
  %v50 = vadd.f32 %v27, %v49
  %51 = vdwg.mxu0
  %v52 = vmax.f32 %v50, 0.0
  %v53 = vld [vmem:[%s4 + $0x10] sm:$0xff]
  %v54 = vld [vmem:[%s4 + $0x18] sm:$0xff]
  %v55 = vld [vmem:[%s4 + $0x20] sm:$0xff]
  %v56 = vld [vmem:[%s4 + $0x28] sm:$0xff]
  %v57 = vld [vmem:[%s4 + $0x30] sm:$0xff]
  %v58 = vld [vmem:[%s4 + $0x38] sm:$0xff]
  %v59 = vld [vmem:[%s4 + $0x40] sm:$0xff]
  %v60 = vld [vmem:[%s4 + $0x48] sm:$0xff]
  %v61 = vld [vmem:[%s5 + $0x1] sm:$0x1]
  %v62 = vperm.slane %v61, 0
  %vm63 = vcmask 523264
  %v65 = vsel %vm63, %v52, 0
  %67 = vmatpush.msra.mxu0 0.0
  %68 = vmatpush.msra.mxu0 0.0
  %69 = vmatpush.msra.mxu0 0.0
  %70 = vmatpush.msra.mxu0 0.0
  %71 = vmatpush.msra.mxu0 0.0
  %72 = vmatpush.msra.mxu0 0.0
  %73 = vmatpush.msra.mxu0 0.0
  %74 = vmatpush.msra.mxu0 0.0
  %75 = vmatpush.msra.mxu0 %v60
  %76 = vmatpush.msra.mxu0 %v59
  %77 = vmatpush.msra.mxu0 %v58
  %78 = vmatpush.msra.mxu0 %v57
  %79 = vmatpush.msra.mxu0 %v56
  %80 = vmatpush.msra.mxu0 %v55
  %81 = vmatpush.msra.mxu0 %v54
  %82 = vmatpush.msra.mxu0 %v53
  %83 = vmatmul.f32.gmra.mxu0 %v65
  %v84 = vpop.f32.mrf.mxu0
  %v85 = vadd.f32 %v62, %v84
  %86 = vdwg.mxu0
  %v87 = vld [vmem:[%s3] sm:$0xff]
  %v88 = vld [vmem:[%s3 + $0x8] sm:$0xff]
  %v89 = vld [vmem:[%s4 + $0x50] sm:$0xff]
  %v90 = vld [vmem:[%s4 + $0x58] sm:$0xff]
  %v91 = vld [vmem:[%s4 + $0x60] sm:$0xff]
  %v92 = vld [vmem:[%s5 + $0x2] sm:$0x1]
  %v93 = vperm.slane %v92, 0
  %vm94 = vcmask 195584
  %v96 = vsel %vm94, %v87, 0
  %v99 = vsel %vm94, %v88, 0
  %101 = vmatpush.msra.mxu0 0.0
  %102 = vmatpush.msra.mxu0 0.0
  %103 = vmatpush.msra.mxu0 0.0
  %104 = vmatpush.msra.mxu0 0.0
  %105 = vmatpush.msra.mxu0 0.0
  %106 = vmatpush.msra.mxu0 0.0
  %107 = vmatpush.msra.mxu0 0.0
  %108 = vmatpush.msra.mxu0 0.0
  %109 = vmatpush.msra.mxu0 0.0
  %110 = vmatpush.msra.mxu0 0.0
  %111 = vmatpush.msra.mxu0 0.0
  %112 = vmatpush.msra.mxu0 0.0
  %113 = vmatpush.msra.mxu0 0.0
  %114 = vmatpush.msra.mxu0 %v91
  %115 = vmatpush.msra.mxu0 %v90
  %116 = vmatpush.msra.mxu0 %v89
  %117 = vmatmul.f32.gmra.mxu0 %v96
  %v118 = vpop.f32.mrf.mxu0
  %v119 = vadd.f32 %v93, %v118
  %120 = vmatmul.f32.gmra.mxu0 %v99
  %v121 = vpop.f32.mrf.mxu0
  %v122 = vadd.f32 %v93, %v121
  %123 = vdwg.mxu0
  %v124 = vmax.f32 %v119, 0.0
  %v125 = vmax.f32 %v122, 0.0
  %v126 = vld [vmem:[%s4 + $0x68] sm:$0xff]
  %v127 = vld [vmem:[%s4 + $0x70] sm:$0xff]
  %v128 = vld [vmem:[%s4 + $0x78] sm:$0xff]
  %v129 = vld [vmem:[%s4 + $0x80] sm:$0xff]
  %v130 = vld [vmem:[%s4 + $0x88] sm:$0xff]
  %v131 = vld [vmem:[%s4 + $0x90] sm:$0xff]
  %v132 = vld [vmem:[%s4 + $0x98] sm:$0xff]
  %v133 = vld [vmem:[%s4 + $0xa0] sm:$0xff]
  %v134 = vld [vmem:[%s5 + $0x3] sm:$0x1]
  %v135 = vperm.slane %v134, 0
  %v137 = vsel %vm63, %v124, 0
  %v140 = vsel %vm63, %v125, 0
  %142 = vmatpush.msra.mxu0 0.0
  %143 = vmatpush.msra.mxu0 0.0
  %144 = vmatpush.msra.mxu0 0.0
  %145 = vmatpush.msra.mxu0 0.0
  %146 = vmatpush.msra.mxu0 0.0
  %147 = vmatpush.msra.mxu0 0.0
  %148 = vmatpush.msra.mxu0 0.0
  %149 = vmatpush.msra.mxu0 0.0
  %150 = vmatpush.msra.mxu0 %v133
  %151 = vmatpush.msra.mxu0 %v132
  %152 = vmatpush.msra.mxu0 %v131
  %153 = vmatpush.msra.mxu0 %v130
  %154 = vmatpush.msra.mxu0 %v129
  %155 = vmatpush.msra.mxu0 %v128
  %156 = vmatpush.msra.mxu0 %v127
  %157 = vmatpush.msra.mxu0 %v126
  %158 = vmatmul.f32.gmra.mxu0 %v137
  %v159 = vpop.f32.mrf.mxu0
  %v160 = vadd.f32 %v135, %v159
  %161 = vmatmul.f32.gmra.mxu0 %v140
  %v162 = vpop.f32.mrf.mxu0
  %v163 = vadd.f32 %v135, %v162
  %164 = vdwg.mxu0
  %v165 = vlaneseq
  %v166 = vand.u32 %v165, 127
  %v167 = vld [vmem:[%s0] sm:$0xff]
  %v168 = vld [vmem:[%s0 + $0x8] sm:$0xff]
  %v169 = vld [vmem:[%s0 + $0x10] sm:$0xff]
  %v170 = vld [vmem:[%s0 + $0x18] sm:$0xff]
  %171 = vset.pattern.permute.xlu0 0
  %172 = vperm.xlu0 %171, %v167
  %v173 = vpop.permute.xlu0 %172
  %174 = vset.pattern.permute.xlu0 0
  %175 = vperm.xlu0 %174, %v168
  %v176 = vpop.permute.xlu0 %175
  %177 = vset.pattern.permute.xlu0 0
  %178 = vperm.xlu0 %177, %v169
  %v179 = vpop.permute.xlu0 %178
  %180 = vset.pattern.permute.xlu0 0
  %181 = vperm.xlu0 %180, %v170
  %v182 = vpop.permute.xlu0 %181
  %vm183 = vcmp.eq.s32.totalorder %v166, %v173
  %vm184 = vcmp.eq.s32.totalorder %v166, %v176
  %vm185 = vcmp.eq.s32.totalorder %v166, %v179
  %vm186 = vcmp.eq.s32.totalorder %v166, %v182
  %v187 = vsel %vm183, 1, 0
  %v188 = vsel %vm184, 1, 0
  %v189 = vsel %vm185, 1, 0
  %v190 = vsel %vm186, 1, 0
  %v191 = vcvt.s32.f32 %v187
  %v192 = vcvt.s32.f32 %v188
  %v193 = vcvt.s32.f32 %v189
  %v194 = vcvt.s32.f32 %v190
  %v195 = vlaneseq
  %v196 = vshrl.u32 %v195, 7
  %v197 = vld [vmem:[%s1] sm:$0x1]
  %v198 = vperm.slane %v197, 0
  %vm199 = vcmp.eq.s32.totalorder %v196, %v198
  %v200 = vsel %vm199, 1, 0
  %v201 = vcvt.s32.f32 %v200
  %v202 = vld [vmem:[%s5 + $0x4] sm:$0x1]
  %v203 = vld [vmem:[%s5 + $0x5] sm:$0x1]
  %v204 = vld [vmem:[%s5 + $0x6] sm:$0x1]
  %vm205 = vcmask 64512
  %v207 = vsel %vm205, %v191, 0
  %v210 = vsel %vm205, %v192, 0
  %v213 = vsel %vm205, %v193, 0
  %v216 = vsel %vm205, %v194, 0
  %218 = vmatpush.msra.mxu0 0.0
  %219 = vmatpush.msra.mxu0 0.0
  %220 = vmatpush.msra.mxu0 0.0
  %221 = vmatpush.msra.mxu0 0.0
  %222 = vmatpush.msra.mxu0 0.0
  %223 = vmatpush.msra.mxu0 0.0
  %224 = vmatpush.msra.mxu0 0.0
  %225 = vmatpush.msra.mxu0 0.0
  %226 = vmatpush.msra.mxu0 0.0
  %227 = vmatpush.msra.mxu0 0.0
  %228 = vmatpush.msra.mxu0 0.0
  %229 = vmatpush.msra.mxu0 0.0
  %230 = vmatpush.msra.mxu0 0.0
  %231 = vmatpush.msra.mxu0 0.0
  %232 = vmatpush.msra.mxu0 0.0
  %v233 = vand.u32 %v85, 4294901760
  %234 = vmatpush.msra.mxu0 %v233
  %v235 = vand.u32 %v207, 4294901760
  %v236 = vsub.f32 %v207, %v235
  %v237 = vand.u32 %v236, 4294901760
  %v238 = vsub.f32 %v236, %v237
  %v239 = vand.u32 %v238, 4294901760
  %240 = vmatmul.f32.gmra.mxu0 %v239
  %v241 = vpop.f32.mrf.mxu0
  %v242 = vadd.f32 0.0, %v241
  %v243 = vand.u32 %v210, 4294901760
  %v244 = vsub.f32 %v210, %v243
  %v245 = vand.u32 %v244, 4294901760
  %v246 = vsub.f32 %v244, %v245
  %v247 = vand.u32 %v246, 4294901760
  %248 = vmatmul.f32.gmra.mxu0 %v247
  %v249 = vpop.f32.mrf.mxu0
  %v250 = vadd.f32 0.0, %v249
  %v251 = vand.u32 %v213, 4294901760
  %v252 = vsub.f32 %v213, %v251
  %v253 = vand.u32 %v252, 4294901760
  %v254 = vsub.f32 %v252, %v253
  %v255 = vand.u32 %v254, 4294901760
  %256 = vmatmul.f32.gmra.mxu0 %v255
  %v257 = vpop.f32.mrf.mxu0
  %v258 = vadd.f32 0.0, %v257
  %v259 = vand.u32 %v216, 4294901760
  %v260 = vsub.f32 %v216, %v259
  %v261 = vand.u32 %v260, 4294901760
  %v262 = vsub.f32 %v260, %v261
  %v263 = vand.u32 %v262, 4294901760
  %264 = vmatmul.f32.gmra.mxu0 %v263
  %v265 = vpop.f32.mrf.mxu0
  %v266 = vadd.f32 0.0, %v265
  %267 = vdwg.mxu0
  %268 = vmatpush.msra.mxu0 0.0
  %269 = vmatpush.msra.mxu0 0.0
  %270 = vmatpush.msra.mxu0 0.0
  %271 = vmatpush.msra.mxu0 0.0
  %272 = vmatpush.msra.mxu0 0.0
  %273 = vmatpush.msra.mxu0 0.0
  %274 = vmatpush.msra.mxu0 0.0
  %275 = vmatpush.msra.mxu0 0.0
  %276 = vmatpush.msra.mxu0 0.0
  %277 = vmatpush.msra.mxu0 0.0
  %278 = vmatpush.msra.mxu0 0.0
  %279 = vmatpush.msra.mxu0 0.0
  %280 = vmatpush.msra.mxu0 0.0
  %281 = vmatpush.msra.mxu0 0.0
  %282 = vmatpush.msra.mxu0 0.0
  %v283 = vand.u32 %v85, 4294901760
  %v284 = vsub.f32 %v85, %v283
  %v285 = vand.u32 %v284, 4294901760
  %v286 = vsub.f32 %v284, %v285
  %v287 = vand.u32 %v286, 4294901760
  %288 = vmatpush.msra.mxu0 %v287
  %v289 = vand.u32 %v207, 4294901760
  %290 = vmatmul.f32.gmra.mxu0 %v289
  %v291 = vpop.f32.mrf.mxu0
  %v292 = vadd.f32 %v242, %v291
  %v293 = vand.u32 %v210, 4294901760
  %294 = vmatmul.f32.gmra.mxu0 %v293
  %v295 = vpop.f32.mrf.mxu0
  %v296 = vadd.f32 %v250, %v295
  %v297 = vand.u32 %v213, 4294901760
  %298 = vmatmul.f32.gmra.mxu0 %v297
  %v299 = vpop.f32.mrf.mxu0
  %v300 = vadd.f32 %v258, %v299
  %v301 = vand.u32 %v216, 4294901760
  %302 = vmatmul.f32.gmra.mxu0 %v301
  %v303 = vpop.f32.mrf.mxu0
  %v304 = vadd.f32 %v266, %v303
  %305 = vdwg.mxu0
  %306 = vmatpush.msra.mxu0 0.0
  %307 = vmatpush.msra.mxu0 0.0
  %308 = vmatpush.msra.mxu0 0.0
  %309 = vmatpush.msra.mxu0 0.0
  %310 = vmatpush.msra.mxu0 0.0
  %311 = vmatpush.msra.mxu0 0.0
  %312 = vmatpush.msra.mxu0 0.0
  %313 = vmatpush.msra.mxu0 0.0
  %314 = vmatpush.msra.mxu0 0.0
  %315 = vmatpush.msra.mxu0 0.0
  %316 = vmatpush.msra.mxu0 0.0
  %317 = vmatpush.msra.mxu0 0.0
  %318 = vmatpush.msra.mxu0 0.0
  %319 = vmatpush.msra.mxu0 0.0
  %320 = vmatpush.msra.mxu0 0.0
  %v321 = vand.u32 %v85, 4294901760
  %v322 = vsub.f32 %v85, %v321
  %323 = vmatpush.msra.mxu0 %v322
  %v324 = vand.u32 %v207, 4294901760
  %v325 = vsub.f32 %v207, %v324
  %326 = vmatmul.f32.gmra.mxu0 %v325
  %v327 = vpop.f32.mrf.mxu0
  %v328 = vadd.f32 %v292, %v327
  %v329 = vand.u32 %v210, 4294901760
  %v330 = vsub.f32 %v210, %v329
  %331 = vmatmul.f32.gmra.mxu0 %v330
  %v332 = vpop.f32.mrf.mxu0
  %v333 = vadd.f32 %v296, %v332
  %v334 = vand.u32 %v213, 4294901760
  %v335 = vsub.f32 %v213, %v334
  %336 = vmatmul.f32.gmra.mxu0 %v335
  %v337 = vpop.f32.mrf.mxu0
  %v338 = vadd.f32 %v300, %v337
  %v339 = vand.u32 %v216, 4294901760
  %v340 = vsub.f32 %v216, %v339
  %341 = vmatmul.f32.gmra.mxu0 %v340
  %v342 = vpop.f32.mrf.mxu0
  %v343 = vadd.f32 %v304, %v342
  %344 = vdwg.mxu0
  %345 = vmatpush.msra.mxu0 0.0
  %346 = vmatpush.msra.mxu0 0.0
  %347 = vmatpush.msra.mxu0 0.0
  %348 = vmatpush.msra.mxu0 0.0
  %349 = vmatpush.msra.mxu0 0.0
  %350 = vmatpush.msra.mxu0 0.0
  %351 = vmatpush.msra.mxu0 0.0
  %352 = vmatpush.msra.mxu0 0.0
  %353 = vmatpush.msra.mxu0 0.0
  %354 = vmatpush.msra.mxu0 0.0
  %355 = vmatpush.msra.mxu0 0.0
  %356 = vmatpush.msra.mxu0 0.0
  %357 = vmatpush.msra.mxu0 0.0
  %358 = vmatpush.msra.mxu0 0.0
  %359 = vmatpush.msra.mxu0 0.0
  %v360 = vand.u32 %v85, 4294901760
  %361 = vmatpush.msra.mxu0 %v360
  %v362 = vand.u32 %v207, 4294901760
  %v363 = vsub.f32 %v207, %v362
  %v364 = vand.u32 %v363, 4294901760
  %365 = vmatmul.f32.gmra.mxu0 %v364
  %v366 = vpop.f32.mrf.mxu0
  %v367 = vadd.f32 %v328, %v366
  %v368 = vand.u32 %v210, 4294901760
  %v369 = vsub.f32 %v210, %v368
  %v370 = vand.u32 %v369, 4294901760
  %371 = vmatmul.f32.gmra.mxu0 %v370
  %v372 = vpop.f32.mrf.mxu0
  %v373 = vadd.f32 %v333, %v372
  %v374 = vand.u32 %v213, 4294901760
  %v375 = vsub.f32 %v213, %v374
  %v376 = vand.u32 %v375, 4294901760
  %377 = vmatmul.f32.gmra.mxu0 %v376
  %v378 = vpop.f32.mrf.mxu0
  %v379 = vadd.f32 %v338, %v378
  %v380 = vand.u32 %v216, 4294901760
  %v381 = vsub.f32 %v216, %v380
  %v382 = vand.u32 %v381, 4294901760
  %383 = vmatmul.f32.gmra.mxu0 %v382
  %v384 = vpop.f32.mrf.mxu0
  %v385 = vadd.f32 %v343, %v384
  %386 = vdwg.mxu0
  %387 = vmatpush.msra.mxu0 0.0
  %388 = vmatpush.msra.mxu0 0.0
  %389 = vmatpush.msra.mxu0 0.0
  %390 = vmatpush.msra.mxu0 0.0
  %391 = vmatpush.msra.mxu0 0.0
  %392 = vmatpush.msra.mxu0 0.0
  %393 = vmatpush.msra.mxu0 0.0
  %394 = vmatpush.msra.mxu0 0.0
  %395 = vmatpush.msra.mxu0 0.0
  %396 = vmatpush.msra.mxu0 0.0
  %397 = vmatpush.msra.mxu0 0.0
  %398 = vmatpush.msra.mxu0 0.0
  %399 = vmatpush.msra.mxu0 0.0
  %400 = vmatpush.msra.mxu0 0.0
  %401 = vmatpush.msra.mxu0 0.0
  %v402 = vand.u32 %v85, 4294901760
  %v403 = vsub.f32 %v85, %v402
  %v404 = vand.u32 %v403, 4294901760
  %405 = vmatpush.msra.mxu0 %v404
  %v406 = vand.u32 %v207, 4294901760
  %407 = vmatmul.f32.gmra.mxu0 %v406
  %v408 = vpop.f32.mrf.mxu0
  %v409 = vadd.f32 %v367, %v408
  %v410 = vand.u32 %v210, 4294901760
  %411 = vmatmul.f32.gmra.mxu0 %v410
  %v412 = vpop.f32.mrf.mxu0
  %v413 = vadd.f32 %v373, %v412
  %v414 = vand.u32 %v213, 4294901760
  %415 = vmatmul.f32.gmra.mxu0 %v414
  %v416 = vpop.f32.mrf.mxu0
  %v417 = vadd.f32 %v379, %v416
  %v418 = vand.u32 %v216, 4294901760
  %419 = vmatmul.f32.gmra.mxu0 %v418
  %v420 = vpop.f32.mrf.mxu0
  %v421 = vadd.f32 %v385, %v420
  %422 = vdwg.mxu0
  %423 = vmatpush.msra.mxu0 0.0
  %424 = vmatpush.msra.mxu0 0.0
  %425 = vmatpush.msra.mxu0 0.0
  %426 = vmatpush.msra.mxu0 0.0
  %427 = vmatpush.msra.mxu0 0.0
  %428 = vmatpush.msra.mxu0 0.0
  %429 = vmatpush.msra.mxu0 0.0
  %430 = vmatpush.msra.mxu0 0.0
  %431 = vmatpush.msra.mxu0 0.0
  %432 = vmatpush.msra.mxu0 0.0
  %433 = vmatpush.msra.mxu0 0.0
  %434 = vmatpush.msra.mxu0 0.0
  %435 = vmatpush.msra.mxu0 0.0
  %436 = vmatpush.msra.mxu0 0.0
  %437 = vmatpush.msra.mxu0 0.0
  %v438 = vand.u32 %v85, 4294901760
  %439 = vmatpush.msra.mxu0 %v438
  %v440 = vand.u32 %v207, 4294901760
  %441 = vmatmul.f32.gmra.mxu0 %v440
  %v442 = vpop.f32.mrf.mxu0
  %v443 = vadd.f32 %v409, %v442
  %v444 = vand.u32 %v210, 4294901760
  %445 = vmatmul.f32.gmra.mxu0 %v444
  %v446 = vpop.f32.mrf.mxu0
  %v447 = vadd.f32 %v413, %v446
  %v448 = vand.u32 %v213, 4294901760
  %449 = vmatmul.f32.gmra.mxu0 %v448
  %v450 = vpop.f32.mrf.mxu0
  %v451 = vadd.f32 %v417, %v450
  %v452 = vand.u32 %v216, 4294901760
  %453 = vmatmul.f32.gmra.mxu0 %v452
  %v454 = vpop.f32.mrf.mxu0
  %v455 = vadd.f32 %v421, %v454
  %456 = vdwg.mxu0
  %459 = vrot.lane.b32.xlu0 %v451, 32
  %v460 = vpop.permute.xlu0 %459
  %461 = vrot.lane.b32.xlu0 %v455, 32
  %v462 = vpop.permute.xlu0 %461
  %467 = vrot.lane.b32.xlu0 %v160, 64
  %v468 = vpop.permute.xlu0 %467
  %469 = vrot.lane.b32.xlu0 %v163, 64
  %v470 = vpop.permute.xlu0 %469
  %vm473 = vcmask 261120
  %v474 = vsel %vm473, %v443, %v460
  %v475 = vsel %vm473, %v447, %v462
  %v476 = vsel %vm63, %v474, %v468
  %v477 = vsel %vm63, %v475, %v470
  %v478 = vld [vmem:[%s4 + $0xa8] sm:$0xff]
  %v479 = vld [vmem:[%s4 + $0xb0] sm:$0xff]
  %v480 = vld [vmem:[%s4 + $0xb8] sm:$0xff]
  %v481 = vld [vmem:[%s4 + $0xc0] sm:$0xff]
  %v482 = vld [vmem:[%s4 + $0xc8] sm:$0xff]
  %v483 = vld [vmem:[%s4 + $0xd0] sm:$0xff]
  %v484 = vld [vmem:[%s4 + $0xd8] sm:$0xff]
  %v485 = vld [vmem:[%s4 + $0xe0] sm:$0xff]
  %v486 = vld [vmem:[%s4 + $0xe8] sm:$0xff]
  %v487 = vld [vmem:[%s4 + $0xf0] sm:$0xff]
  %v488 = vld [vmem:[%s4 + $0xf8] sm:$0xff]
  %v489 = vld [vmem:[%s4 + $0x100] sm:$0xff]
  %v490 = vperm.slane %v202, 0
  %vm491 = vcmask 785408
  %v493 = vsel %vm491, %v476, 0
  %v496 = vsel %vm491, %v477, 0
  %498 = vmatpush.msra.mxu0 0.0
  %499 = vmatpush.msra.mxu0 0.0
  %500 = vmatpush.msra.mxu0 0.0
  %501 = vmatpush.msra.mxu0 0.0
  %502 = vmatpush.msra.mxu0 %v489
  %503 = vmatpush.msra.mxu0 %v488
  %504 = vmatpush.msra.mxu0 %v487
  %505 = vmatpush.msra.mxu0 %v486
  %506 = vmatpush.msra.mxu0 %v485
  %507 = vmatpush.msra.mxu0 %v484
  %508 = vmatpush.msra.mxu0 %v483
  %509 = vmatpush.msra.mxu0 %v482
  %510 = vmatpush.msra.mxu0 %v481
  %511 = vmatpush.msra.mxu0 %v480
  %512 = vmatpush.msra.mxu0 %v479
  %513 = vmatpush.msra.mxu0 %v478
  %514 = vmatmul.f32.gmra.mxu0 %v493
  %v515 = vpop.f32.mrf.mxu0
  %v516 = vadd.f32 %v490, %v515
  %517 = vmatmul.f32.gmra.mxu0 %v496
  %v518 = vpop.f32.mrf.mxu0
  %v519 = vadd.f32 %v490, %v518
  %520 = vdwg.mxu0
  %v521 = vld [vmem:[%s4 + $0x1a8] sm:$0xff]
  %v522 = vld [vmem:[%s4 + $0x1b0] sm:$0xff]
  %v523 = vld [vmem:[%s4 + $0x1b8] sm:$0xff]
  %v524 = vld [vmem:[%s4 + $0x1c0] sm:$0xff]
  %v525 = vperm.slane %v204, 0
  %v527 = vsel %vm473, %v443, 0
  %v530 = vsel %vm473, %v447, 0
  %532 = vmatpush.msra.mxu0 0.0
  %533 = vmatpush.msra.mxu0 0.0
  %534 = vmatpush.msra.mxu0 0.0
  %535 = vmatpush.msra.mxu0 0.0
  %536 = vmatpush.msra.mxu0 0.0
  %537 = vmatpush.msra.mxu0 0.0
  %538 = vmatpush.msra.mxu0 0.0
  %539 = vmatpush.msra.mxu0 0.0
  %540 = vmatpush.msra.mxu0 0.0
  %541 = vmatpush.msra.mxu0 0.0
  %542 = vmatpush.msra.mxu0 0.0
  %543 = vmatpush.msra.mxu0 0.0
  %544 = vmatpush.msra.mxu0 %v524
  %545 = vmatpush.msra.mxu0 %v523
  %546 = vmatpush.msra.mxu0 %v522
  %547 = vmatpush.msra.mxu0 %v521
  %548 = vmatmul.f32.gmra.mxu0 %v527
  %v549 = vpop.f32.mrf.mxu0
  %v550 = vadd.f32 %v525, %v549
  %551 = vmatmul.f32.gmra.mxu0 %v530
  %v552 = vpop.f32.mrf.mxu0
  %v553 = vadd.f32 %v525, %v552
  %554 = vdwg.mxu0
  %v555 = vld [vmem:[%s4 + $0x108] sm:$0xff]
  %v556 = vld [vmem:[%s4 + $0x110] sm:$0xff]
  %v557 = vld [vmem:[%s4 + $0x118] sm:$0xff]
  %v558 = vld [vmem:[%s4 + $0x120] sm:$0xff]
  %v559 = vld [vmem:[%s4 + $0x128] sm:$0xff]
  %v560 = vld [vmem:[%s4 + $0x130] sm:$0xff]
  %v561 = vld [vmem:[%s4 + $0x138] sm:$0xff]
  %v562 = vld [vmem:[%s4 + $0x140] sm:$0xff]
  %v563 = vld [vmem:[%s4 + $0x148] sm:$0xff]
  %v564 = vld [vmem:[%s4 + $0x150] sm:$0xff]
  %v565 = vld [vmem:[%s4 + $0x158] sm:$0xff]
  %v566 = vld [vmem:[%s4 + $0x160] sm:$0xff]
  %v567 = vld [vmem:[%s4 + $0x168] sm:$0xff]
  %v568 = vld [vmem:[%s4 + $0x170] sm:$0xff]
  %v569 = vld [vmem:[%s4 + $0x178] sm:$0xff]
  %v570 = vld [vmem:[%s4 + $0x180] sm:$0xff]
  %v571 = vld [vmem:[%s4 + $0x188] sm:$0xff]
  %v572 = vld [vmem:[%s4 + $0x190] sm:$0xff]
  %v573 = vld [vmem:[%s4 + $0x198] sm:$0xff]
  %v574 = vld [vmem:[%s4 + $0x1a0] sm:$0xff]
  %v575 = vld [vmem:[%s4 + $0x1c8] sm:$0xff]
  %v576 = vld [vmem:[%s4 + $0x1d0] sm:$0xff]
  %v577 = vld [vmem:[%s4 + $0x1d8] sm:$0xff]
  %v578 = vld [vmem:[%s4 + $0x1e0] sm:$0xff]
  %v579 = vld [vmem:[%s4 + $0x1e8] sm:$0xff]
  %v580 = vld [vmem:[%s4 + $0x1f0] sm:$0xff]
  %v581 = vld [vmem:[%s4 + $0x1f8] sm:$0xff]
  %v582 = vld [vmem:[%s4 + $0x200] sm:$0xff]
  %583 = vmatpush.msra.mxu0 0.0
  %584 = vmatpush.msra.mxu0 0.0
  %585 = vmatpush.msra.mxu0 0.0
  %586 = vmatpush.msra.mxu0 0.0
  %587 = vmatpush.msra.mxu0 %v566
  %588 = vmatpush.msra.mxu0 %v565
  %589 = vmatpush.msra.mxu0 %v564
  %590 = vmatpush.msra.mxu0 %v563
  %591 = vmatpush.msra.mxu0 %v562
  %592 = vmatpush.msra.mxu0 %v561
  %593 = vmatpush.msra.mxu0 %v560
  %594 = vmatpush.msra.mxu0 %v559
  %595 = vmatpush.msra.mxu0 %v558
  %596 = vmatpush.msra.mxu0 %v557
  %597 = vmatpush.msra.mxu0 %v556
  %598 = vmatpush.msra.mxu0 %v555
  %599 = vmatmul.f32.gmra.mxu0 %v493
  %v600 = vpop.f32.mrf.mxu0
  %v601 = vadd.f32 %v516, %v600
  %602 = vmatmul.f32.gmra.mxu0 %v496
  %v603 = vpop.f32.mrf.mxu0
  %v604 = vadd.f32 %v519, %v603
  %605 = vdwg.mxu0
  %v606 = vmax.f32 %v601, 0.0
  %v607 = vmax.f32 %v604, 0.0
  %v608 = vperm.slane %v203, 0
  %v610 = vsel %vm63, %v606, 0
  %v613 = vsel %vm63, %v607, 0
  %615 = vmatpush.msra.mxu0 0.0
  %616 = vmatpush.msra.mxu0 0.0
  %617 = vmatpush.msra.mxu0 0.0
  %618 = vmatpush.msra.mxu0 0.0
  %619 = vmatpush.msra.mxu0 0.0
  %620 = vmatpush.msra.mxu0 0.0
  %621 = vmatpush.msra.mxu0 0.0
  %622 = vmatpush.msra.mxu0 0.0
  %623 = vmatpush.msra.mxu0 %v574
  %624 = vmatpush.msra.mxu0 %v573
  %625 = vmatpush.msra.mxu0 %v572
  %626 = vmatpush.msra.mxu0 %v571
  %627 = vmatpush.msra.mxu0 %v570
  %628 = vmatpush.msra.mxu0 %v569
  %629 = vmatpush.msra.mxu0 %v568
  %630 = vmatpush.msra.mxu0 %v567
  %631 = vmatmul.f32.gmra.mxu0 %v610
  %v632 = vpop.f32.mrf.mxu0
  %v633 = vadd.f32 %v608, %v632
  %634 = vmatmul.f32.gmra.mxu0 %v613
  %v635 = vpop.f32.mrf.mxu0
  %v636 = vadd.f32 %v608, %v635
  %637 = vdwg.mxu0
  %v638 = vmax.f32 %v633, 0.0
  %v639 = vmax.f32 %v636, 0.0
  %642 = vrot.lane.b32.xlu0 %v638, 32
  %v643 = vpop.permute.xlu0 %642
  %644 = vrot.lane.b32.xlu0 %v639, 32
  %v645 = vpop.permute.xlu0 %644
  %v648 = vsel %vm473, %v443, %v643
  %v649 = vsel %vm473, %v447, %v645
  %v651 = vsel %vm63, %v648, 0
  %v654 = vsel %vm63, %v649, 0
  %656 = vmatpush.msra.mxu0 0.0
  %657 = vmatpush.msra.mxu0 0.0
  %658 = vmatpush.msra.mxu0 0.0
  %659 = vmatpush.msra.mxu0 0.0
  %660 = vmatpush.msra.mxu0 0.0
  %661 = vmatpush.msra.mxu0 0.0
  %662 = vmatpush.msra.mxu0 0.0
  %663 = vmatpush.msra.mxu0 0.0
  %664 = vmatpush.msra.mxu0 %v582
  %665 = vmatpush.msra.mxu0 %v581
  %666 = vmatpush.msra.mxu0 %v580
  %667 = vmatpush.msra.mxu0 %v579
  %668 = vmatpush.msra.mxu0 %v578
  %669 = vmatpush.msra.mxu0 %v577
  %670 = vmatpush.msra.mxu0 %v576
  %671 = vmatpush.msra.mxu0 %v575
  %672 = vmatmul.f32.gmra.mxu0 %v651
  %v673 = vpop.f32.mrf.mxu0
  %v674 = vadd.f32 %v550, %v673
  %675 = vmatmul.f32.gmra.mxu0 %v654
  %v676 = vpop.f32.mrf.mxu0
  %v677 = vadd.f32 %v553, %v676
  %678 = vdwg.mxu0
  %v679 = vmax.f32 %v674, 0.0
  %v680 = vmax.f32 %v677, 0.0
  %v682 = vsel %vm28, %v201, 0
  %684 = vmatpush.msra.mxu0 0.0
  %685 = vmatpush.msra.mxu0 0.0
  %686 = vmatpush.msra.mxu0 0.0
  %687 = vmatpush.msra.mxu0 0.0
  %688 = vmatpush.msra.mxu0 0.0
  %689 = vmatpush.msra.mxu0 0.0
  %690 = vmatpush.msra.mxu0 0.0
  %691 = vmatpush.msra.mxu0 0.0
  %692 = vmatpush.msra.mxu0 0.0
  %693 = vmatpush.msra.mxu0 0.0
  %694 = vmatpush.msra.mxu0 0.0
  %695 = vmatpush.msra.mxu0 0.0
  %696 = vmatpush.msra.mxu0 0.0
  %697 = vmatpush.msra.mxu0 0.0
  %v698 = vand.u32 %v680, 4294901760
  %699 = vmatpush.msra.mxu0 %v698
  %v700 = vand.u32 %v679, 4294901760
  %701 = vmatpush.msra.mxu0 %v700
  %v702 = vand.u32 %v682, 4294901760
  %v703 = vsub.f32 %v682, %v702
  %v704 = vand.u32 %v703, 4294901760
  %v705 = vsub.f32 %v703, %v704
  %v706 = vand.u32 %v705, 4294901760
  %707 = vmatmul.f32.gmra.mxu0 %v706
  %v708 = vpop.f32.mrf.mxu0
  %v709 = vadd.f32 0.0, %v708
  %710 = vdwg.mxu0
  %711 = vmatpush.msra.mxu0 0.0
  %712 = vmatpush.msra.mxu0 0.0
  %713 = vmatpush.msra.mxu0 0.0
  %714 = vmatpush.msra.mxu0 0.0
  %715 = vmatpush.msra.mxu0 0.0
  %716 = vmatpush.msra.mxu0 0.0
  %717 = vmatpush.msra.mxu0 0.0
  %718 = vmatpush.msra.mxu0 0.0
  %719 = vmatpush.msra.mxu0 0.0
  %720 = vmatpush.msra.mxu0 0.0
  %721 = vmatpush.msra.mxu0 0.0
  %722 = vmatpush.msra.mxu0 0.0
  %723 = vmatpush.msra.mxu0 0.0
  %724 = vmatpush.msra.mxu0 0.0
  %v725 = vand.u32 %v680, 4294901760
  %v726 = vsub.f32 %v680, %v725
  %v727 = vand.u32 %v726, 4294901760
  %v728 = vsub.f32 %v726, %v727
  %v729 = vand.u32 %v728, 4294901760
  %730 = vmatpush.msra.mxu0 %v729
  %v731 = vand.u32 %v679, 4294901760
  %v732 = vsub.f32 %v679, %v731
  %v733 = vand.u32 %v732, 4294901760
  %v734 = vsub.f32 %v732, %v733
  %v735 = vand.u32 %v734, 4294901760
  %736 = vmatpush.msra.mxu0 %v735
  %v737 = vand.u32 %v682, 4294901760
  %738 = vmatmul.f32.gmra.mxu0 %v737
  %v739 = vpop.f32.mrf.mxu0
  %v740 = vadd.f32 %v709, %v739
  %741 = vdwg.mxu0
  %742 = vmatpush.msra.mxu0 0.0
  %743 = vmatpush.msra.mxu0 0.0
  %744 = vmatpush.msra.mxu0 0.0
  %745 = vmatpush.msra.mxu0 0.0
  %746 = vmatpush.msra.mxu0 0.0
  %747 = vmatpush.msra.mxu0 0.0
  %748 = vmatpush.msra.mxu0 0.0
  %749 = vmatpush.msra.mxu0 0.0
  %750 = vmatpush.msra.mxu0 0.0
  %751 = vmatpush.msra.mxu0 0.0
  %752 = vmatpush.msra.mxu0 0.0
  %753 = vmatpush.msra.mxu0 0.0
  %754 = vmatpush.msra.mxu0 0.0
  %755 = vmatpush.msra.mxu0 0.0
  %v756 = vand.u32 %v680, 4294901760
  %v757 = vsub.f32 %v680, %v756
  %758 = vmatpush.msra.mxu0 %v757
  %v759 = vand.u32 %v679, 4294901760
  %v760 = vsub.f32 %v679, %v759
  %761 = vmatpush.msra.mxu0 %v760
  %v762 = vand.u32 %v682, 4294901760
  %v763 = vsub.f32 %v682, %v762
  %764 = vmatmul.f32.gmra.mxu0 %v763
  %v765 = vpop.f32.mrf.mxu0
  %v766 = vadd.f32 %v740, %v765
  %767 = vdwg.mxu0
  %768 = vmatpush.msra.mxu0 0.0
  %769 = vmatpush.msra.mxu0 0.0
  %770 = vmatpush.msra.mxu0 0.0
  %771 = vmatpush.msra.mxu0 0.0
  %772 = vmatpush.msra.mxu0 0.0
  %773 = vmatpush.msra.mxu0 0.0
  %774 = vmatpush.msra.mxu0 0.0
  %775 = vmatpush.msra.mxu0 0.0
  %776 = vmatpush.msra.mxu0 0.0
  %777 = vmatpush.msra.mxu0 0.0
  %778 = vmatpush.msra.mxu0 0.0
  %779 = vmatpush.msra.mxu0 0.0
  %780 = vmatpush.msra.mxu0 0.0
  %781 = vmatpush.msra.mxu0 0.0
  %v782 = vand.u32 %v680, 4294901760
  %783 = vmatpush.msra.mxu0 %v782
  %v784 = vand.u32 %v679, 4294901760
  %785 = vmatpush.msra.mxu0 %v784
  %v786 = vand.u32 %v682, 4294901760
  %v787 = vsub.f32 %v682, %v786
  %v788 = vand.u32 %v787, 4294901760
  %789 = vmatmul.f32.gmra.mxu0 %v788
  %v790 = vpop.f32.mrf.mxu0
  %v791 = vadd.f32 %v766, %v790
  %792 = vdwg.mxu0
  %793 = vmatpush.msra.mxu0 0.0
  %794 = vmatpush.msra.mxu0 0.0
  %795 = vmatpush.msra.mxu0 0.0
  %796 = vmatpush.msra.mxu0 0.0
  %797 = vmatpush.msra.mxu0 0.0
  %798 = vmatpush.msra.mxu0 0.0
  %799 = vmatpush.msra.mxu0 0.0
  %800 = vmatpush.msra.mxu0 0.0
  %801 = vmatpush.msra.mxu0 0.0
  %802 = vmatpush.msra.mxu0 0.0
  %803 = vmatpush.msra.mxu0 0.0
  %804 = vmatpush.msra.mxu0 0.0
  %805 = vmatpush.msra.mxu0 0.0
  %806 = vmatpush.msra.mxu0 0.0
  %v807 = vand.u32 %v680, 4294901760
  %v808 = vsub.f32 %v680, %v807
  %v809 = vand.u32 %v808, 4294901760
  %810 = vmatpush.msra.mxu0 %v809
  %v811 = vand.u32 %v679, 4294901760
  %v812 = vsub.f32 %v679, %v811
  %v813 = vand.u32 %v812, 4294901760
  %814 = vmatpush.msra.mxu0 %v813
  %v815 = vand.u32 %v682, 4294901760
  %816 = vmatmul.f32.gmra.mxu0 %v815
  %v817 = vpop.f32.mrf.mxu0
  %v818 = vadd.f32 %v791, %v817
  %819 = vdwg.mxu0
  %820 = vmatpush.msra.mxu0 0.0
  %821 = vmatpush.msra.mxu0 0.0
  %822 = vmatpush.msra.mxu0 0.0
  %823 = vmatpush.msra.mxu0 0.0
  %824 = vmatpush.msra.mxu0 0.0
  %825 = vmatpush.msra.mxu0 0.0
  %826 = vmatpush.msra.mxu0 0.0
  %827 = vmatpush.msra.mxu0 0.0
  %828 = vmatpush.msra.mxu0 0.0
  %829 = vmatpush.msra.mxu0 0.0
  %830 = vmatpush.msra.mxu0 0.0
  %831 = vmatpush.msra.mxu0 0.0
  %832 = vmatpush.msra.mxu0 0.0
  %833 = vmatpush.msra.mxu0 0.0
  %v834 = vand.u32 %v680, 4294901760
  %835 = vmatpush.msra.mxu0 %v834
  %v836 = vand.u32 %v679, 4294901760
  %837 = vmatpush.msra.mxu0 %v836
  %v838 = vand.u32 %v682, 4294901760
  %839 = vmatmul.f32.gmra.mxu0 %v838
  %v840 = vpop.f32.mrf.mxu0
  %v841 = vadd.f32 %v818, %v840
  %842 = vdwg.mxu0
  %843 = vmatpush.msra.mxu0 0.0
  %844 = vmatpush.msra.mxu0 0.0
  %845 = vmatpush.msra.mxu0 0.0
  %846 = vmatpush.msra.mxu0 0.0
  %847 = vmatpush.msra.mxu0 0.0
  %848 = vmatpush.msra.mxu0 0.0
  %849 = vmatpush.msra.mxu0 0.0
  %850 = vmatpush.msra.mxu0 0.0
  %851 = vmatpush.msra.mxu0 0.0
  %852 = vmatpush.msra.mxu0 0.0
  %853 = vmatpush.msra.mxu0 0.0
  %854 = vmatpush.msra.mxu0 0.0
  %855 = vmatpush.msra.mxu0 0.0
  %856 = vmatpush.msra.mxu0 0.0
  %857 = vmatpush.msra.mxu0 0.0
  %v858 = vand.u32 %v841, 4294901760
  %859 = vmatpush.msra.mxu0 %v858
  %v860 = vand.u32 %v207, 4294901760
  %v861 = vsub.f32 %v207, %v860
  %v862 = vand.u32 %v861, 4294901760
  %v863 = vsub.f32 %v861, %v862
  %v864 = vand.u32 %v863, 4294901760
  %865 = vmatmul.f32.gmra.mxu0 %v864
  %v866 = vpop.f32.mrf.mxu0
  %v867 = vadd.f32 0.0, %v866
  %v868 = vand.u32 %v210, 4294901760
  %v869 = vsub.f32 %v210, %v868
  %v870 = vand.u32 %v869, 4294901760
  %v871 = vsub.f32 %v869, %v870
  %v872 = vand.u32 %v871, 4294901760
  %873 = vmatmul.f32.gmra.mxu0 %v872
  %v874 = vpop.f32.mrf.mxu0
  %v875 = vadd.f32 0.0, %v874
  %v876 = vand.u32 %v213, 4294901760
  %v877 = vsub.f32 %v213, %v876
  %v878 = vand.u32 %v877, 4294901760
  %v879 = vsub.f32 %v877, %v878
  %v880 = vand.u32 %v879, 4294901760
  %881 = vmatmul.f32.gmra.mxu0 %v880
  %v882 = vpop.f32.mrf.mxu0
  %v883 = vadd.f32 0.0, %v882
  %v884 = vand.u32 %v216, 4294901760
  %v885 = vsub.f32 %v216, %v884
  %v886 = vand.u32 %v885, 4294901760
  %v887 = vsub.f32 %v885, %v886
  %v888 = vand.u32 %v887, 4294901760
  %889 = vmatmul.f32.gmra.mxu0 %v888
  %v890 = vpop.f32.mrf.mxu0
  %v891 = vadd.f32 0.0, %v890
  %892 = vdwg.mxu0
  %893 = vmatpush.msra.mxu0 0.0
  %894 = vmatpush.msra.mxu0 0.0
  %895 = vmatpush.msra.mxu0 0.0
  %896 = vmatpush.msra.mxu0 0.0
  %897 = vmatpush.msra.mxu0 0.0
  %898 = vmatpush.msra.mxu0 0.0
  %899 = vmatpush.msra.mxu0 0.0
  %900 = vmatpush.msra.mxu0 0.0
  %901 = vmatpush.msra.mxu0 0.0
  %902 = vmatpush.msra.mxu0 0.0
  %903 = vmatpush.msra.mxu0 0.0
  %904 = vmatpush.msra.mxu0 0.0
  %905 = vmatpush.msra.mxu0 0.0
  %906 = vmatpush.msra.mxu0 0.0
  %907 = vmatpush.msra.mxu0 0.0
  %v908 = vand.u32 %v841, 4294901760
  %v909 = vsub.f32 %v841, %v908
  %v910 = vand.u32 %v909, 4294901760
  %v911 = vsub.f32 %v909, %v910
  %v912 = vand.u32 %v911, 4294901760
  %913 = vmatpush.msra.mxu0 %v912
  %v914 = vand.u32 %v207, 4294901760
  %915 = vmatmul.f32.gmra.mxu0 %v914
  %v916 = vpop.f32.mrf.mxu0
  %v917 = vadd.f32 %v867, %v916
  %v918 = vand.u32 %v210, 4294901760
  %919 = vmatmul.f32.gmra.mxu0 %v918
  %v920 = vpop.f32.mrf.mxu0
  %v921 = vadd.f32 %v875, %v920
  %v922 = vand.u32 %v213, 4294901760
  %923 = vmatmul.f32.gmra.mxu0 %v922
  %v924 = vpop.f32.mrf.mxu0
  %v925 = vadd.f32 %v883, %v924
  %v926 = vand.u32 %v216, 4294901760
  %927 = vmatmul.f32.gmra.mxu0 %v926
  %v928 = vpop.f32.mrf.mxu0
  %v929 = vadd.f32 %v891, %v928
  %930 = vdwg.mxu0
  %931 = vmatpush.msra.mxu0 0.0
  %932 = vmatpush.msra.mxu0 0.0
  %933 = vmatpush.msra.mxu0 0.0
  %934 = vmatpush.msra.mxu0 0.0
  %935 = vmatpush.msra.mxu0 0.0
  %936 = vmatpush.msra.mxu0 0.0
  %937 = vmatpush.msra.mxu0 0.0
  %938 = vmatpush.msra.mxu0 0.0
  %939 = vmatpush.msra.mxu0 0.0
  %940 = vmatpush.msra.mxu0 0.0
  %941 = vmatpush.msra.mxu0 0.0
  %942 = vmatpush.msra.mxu0 0.0
  %943 = vmatpush.msra.mxu0 0.0
  %944 = vmatpush.msra.mxu0 0.0
  %945 = vmatpush.msra.mxu0 0.0
  %v946 = vand.u32 %v841, 4294901760
  %v947 = vsub.f32 %v841, %v946
  %948 = vmatpush.msra.mxu0 %v947
  %v949 = vand.u32 %v207, 4294901760
  %v950 = vsub.f32 %v207, %v949
  %951 = vmatmul.f32.gmra.mxu0 %v950
  %v952 = vpop.f32.mrf.mxu0
  %v953 = vadd.f32 %v917, %v952
  %v954 = vand.u32 %v210, 4294901760
  %v955 = vsub.f32 %v210, %v954
  %956 = vmatmul.f32.gmra.mxu0 %v955
  %v957 = vpop.f32.mrf.mxu0
  %v958 = vadd.f32 %v921, %v957
  %v959 = vand.u32 %v213, 4294901760
  %v960 = vsub.f32 %v213, %v959
  %961 = vmatmul.f32.gmra.mxu0 %v960
  %v962 = vpop.f32.mrf.mxu0
  %v963 = vadd.f32 %v925, %v962
  %v964 = vand.u32 %v216, 4294901760
  %v965 = vsub.f32 %v216, %v964
  %966 = vmatmul.f32.gmra.mxu0 %v965
  %v967 = vpop.f32.mrf.mxu0
  %v968 = vadd.f32 %v929, %v967
  %969 = vdwg.mxu0
  %970 = vmatpush.msra.mxu0 0.0
  %971 = vmatpush.msra.mxu0 0.0
  %972 = vmatpush.msra.mxu0 0.0
  %973 = vmatpush.msra.mxu0 0.0
  %974 = vmatpush.msra.mxu0 0.0
  %975 = vmatpush.msra.mxu0 0.0
  %976 = vmatpush.msra.mxu0 0.0
  %977 = vmatpush.msra.mxu0 0.0
  %978 = vmatpush.msra.mxu0 0.0
  %979 = vmatpush.msra.mxu0 0.0
  %980 = vmatpush.msra.mxu0 0.0
  %981 = vmatpush.msra.mxu0 0.0
  %982 = vmatpush.msra.mxu0 0.0
  %983 = vmatpush.msra.mxu0 0.0
  %984 = vmatpush.msra.mxu0 0.0
  %v985 = vand.u32 %v841, 4294901760
  %986 = vmatpush.msra.mxu0 %v985
  %v987 = vand.u32 %v207, 4294901760
  %v988 = vsub.f32 %v207, %v987
  %v989 = vand.u32 %v988, 4294901760
  %990 = vmatmul.f32.gmra.mxu0 %v989
  %v991 = vpop.f32.mrf.mxu0
  %v992 = vadd.f32 %v953, %v991
  %v993 = vand.u32 %v210, 4294901760
  %v994 = vsub.f32 %v210, %v993
  %v995 = vand.u32 %v994, 4294901760
  %996 = vmatmul.f32.gmra.mxu0 %v995
  %v997 = vpop.f32.mrf.mxu0
  %v998 = vadd.f32 %v958, %v997
  %v999 = vand.u32 %v213, 4294901760
  %v1000 = vsub.f32 %v213, %v999
  %v1001 = vand.u32 %v1000, 4294901760
  %1002 = vmatmul.f32.gmra.mxu0 %v1001
  %v1003 = vpop.f32.mrf.mxu0
  %v1004 = vadd.f32 %v963, %v1003
  %v1005 = vand.u32 %v216, 4294901760
  %v1006 = vsub.f32 %v216, %v1005
  %v1007 = vand.u32 %v1006, 4294901760
  %1008 = vmatmul.f32.gmra.mxu0 %v1007
  %v1009 = vpop.f32.mrf.mxu0
  %v1010 = vadd.f32 %v968, %v1009
  %1011 = vdwg.mxu0
  %1012 = vmatpush.msra.mxu0 0.0
  %1013 = vmatpush.msra.mxu0 0.0
  %1014 = vmatpush.msra.mxu0 0.0
  %1015 = vmatpush.msra.mxu0 0.0
  %1016 = vmatpush.msra.mxu0 0.0
  %1017 = vmatpush.msra.mxu0 0.0
  %1018 = vmatpush.msra.mxu0 0.0
  %1019 = vmatpush.msra.mxu0 0.0
  %1020 = vmatpush.msra.mxu0 0.0
  %1021 = vmatpush.msra.mxu0 0.0
  %1022 = vmatpush.msra.mxu0 0.0
  %1023 = vmatpush.msra.mxu0 0.0
  %1024 = vmatpush.msra.mxu0 0.0
  %1025 = vmatpush.msra.mxu0 0.0
  %1026 = vmatpush.msra.mxu0 0.0
  %v1027 = vand.u32 %v841, 4294901760
  %v1028 = vsub.f32 %v841, %v1027
  %v1029 = vand.u32 %v1028, 4294901760
  %1030 = vmatpush.msra.mxu0 %v1029
  %v1031 = vand.u32 %v207, 4294901760
  %1032 = vmatmul.f32.gmra.mxu0 %v1031
  %v1033 = vpop.f32.mrf.mxu0
  %v1034 = vadd.f32 %v992, %v1033
  %v1035 = vand.u32 %v210, 4294901760
  %1036 = vmatmul.f32.gmra.mxu0 %v1035
  %v1037 = vpop.f32.mrf.mxu0
  %v1038 = vadd.f32 %v998, %v1037
  %v1039 = vand.u32 %v213, 4294901760
  %1040 = vmatmul.f32.gmra.mxu0 %v1039
  %v1041 = vpop.f32.mrf.mxu0
  %v1042 = vadd.f32 %v1004, %v1041
  %v1043 = vand.u32 %v216, 4294901760
  %1044 = vmatmul.f32.gmra.mxu0 %v1043
  %v1045 = vpop.f32.mrf.mxu0
  %v1046 = vadd.f32 %v1010, %v1045
  %1047 = vdwg.mxu0
  %1048 = vmatpush.msra.mxu0 0.0
  %1049 = vmatpush.msra.mxu0 0.0
  %1050 = vmatpush.msra.mxu0 0.0
  %1051 = vmatpush.msra.mxu0 0.0
  %1052 = vmatpush.msra.mxu0 0.0
  %1053 = vmatpush.msra.mxu0 0.0
  %1054 = vmatpush.msra.mxu0 0.0
  %1055 = vmatpush.msra.mxu0 0.0
  %1056 = vmatpush.msra.mxu0 0.0
  %1057 = vmatpush.msra.mxu0 0.0
  %1058 = vmatpush.msra.mxu0 0.0
  %1059 = vmatpush.msra.mxu0 0.0
  %1060 = vmatpush.msra.mxu0 0.0
  %1061 = vmatpush.msra.mxu0 0.0
  %1062 = vmatpush.msra.mxu0 0.0
  %v1063 = vand.u32 %v841, 4294901760
  %1064 = vmatpush.msra.mxu0 %v1063
  %v1065 = vand.u32 %v207, 4294901760
  %1066 = vmatmul.f32.gmra.mxu0 %v1065
  %v1067 = vpop.f32.mrf.mxu0
  %v1068 = vadd.f32 %v1034, %v1067
  %v1069 = vand.u32 %v210, 4294901760
  %1070 = vmatmul.f32.gmra.mxu0 %v1069
  %v1071 = vpop.f32.mrf.mxu0
  %v1072 = vadd.f32 %v1038, %v1071
  %v1073 = vand.u32 %v213, 4294901760
  %1074 = vmatmul.f32.gmra.mxu0 %v1073
  %v1075 = vpop.f32.mrf.mxu0
  %v1076 = vadd.f32 %v1042, %v1075
  %v1077 = vand.u32 %v216, 4294901760
  %1078 = vmatmul.f32.gmra.mxu0 %v1077
  %v1079 = vpop.f32.mrf.mxu0
  %v1080 = vadd.f32 %v1046, %v1079
  %1081 = vdwg.mxu0
  %1084 = vrot.lane.b32.xlu0 %v1076, 32
  %v1085 = vpop.permute.xlu0 %1084
  %1086 = vrot.lane.b32.xlu0 %v1080, 32
  %v1087 = vpop.permute.xlu0 %1086
  %1090 = vrot.lane.b32.xlu0 %v638, 64
  %v1091 = vpop.permute.xlu0 %1090
  %1092 = vrot.lane.b32.xlu0 %v639, 64
  %v1093 = vpop.permute.xlu0 %1092
  %v1096 = vsel %vm473, %v1068, %v1085
  %v1097 = vsel %vm473, %v1072, %v1087
  %v1098 = vsel %vm63, %v1096, %v1091
  %v1099 = vsel %vm63, %v1097, %v1093
  %v1101 = vsel %vm491, %v1098, 0
  %v1104 = vsel %vm491, %v1099, 0
  %1106 = vmatpush.msra.mxu0 0.0
  %1107 = vmatpush.msra.mxu0 0.0
  %1108 = vmatpush.msra.mxu0 0.0
  %1109 = vmatpush.msra.mxu0 0.0
  %1110 = vmatpush.msra.mxu0 %v566
  %1111 = vmatpush.msra.mxu0 %v565
  %1112 = vmatpush.msra.mxu0 %v564
  %1113 = vmatpush.msra.mxu0 %v563
  %1114 = vmatpush.msra.mxu0 %v562
  %1115 = vmatpush.msra.mxu0 %v561
  %1116 = vmatpush.msra.mxu0 %v560
  %1117 = vmatpush.msra.mxu0 %v559
  %1118 = vmatpush.msra.mxu0 %v558
  %1119 = vmatpush.msra.mxu0 %v557
  %1120 = vmatpush.msra.mxu0 %v556
  %1121 = vmatpush.msra.mxu0 %v555
  %1122 = vmatmul.f32.gmra.mxu0 %v1101
  %v1123 = vpop.f32.mrf.mxu0
  %v1124 = vadd.f32 %v516, %v1123
  %1125 = vmatmul.f32.gmra.mxu0 %v1104
  %v1126 = vpop.f32.mrf.mxu0
  %v1127 = vadd.f32 %v519, %v1126
  %1128 = vdwg.mxu0
  %v1129 = vmax.f32 %v1124, 0.0
  %v1130 = vmax.f32 %v1127, 0.0
  %v1132 = vsel %vm63, %v1129, 0
  %v1135 = vsel %vm63, %v1130, 0
  %1137 = vmatpush.msra.mxu0 0.0
  %1138 = vmatpush.msra.mxu0 0.0
  %1139 = vmatpush.msra.mxu0 0.0
  %1140 = vmatpush.msra.mxu0 0.0
  %1141 = vmatpush.msra.mxu0 0.0
  %1142 = vmatpush.msra.mxu0 0.0
  %1143 = vmatpush.msra.mxu0 0.0
  %1144 = vmatpush.msra.mxu0 0.0
  %1145 = vmatpush.msra.mxu0 %v574
  %1146 = vmatpush.msra.mxu0 %v573
  %1147 = vmatpush.msra.mxu0 %v572
  %1148 = vmatpush.msra.mxu0 %v571
  %1149 = vmatpush.msra.mxu0 %v570
  %1150 = vmatpush.msra.mxu0 %v569
  %1151 = vmatpush.msra.mxu0 %v568
  %1152 = vmatpush.msra.mxu0 %v567
  %1153 = vmatmul.f32.gmra.mxu0 %v1132
  %v1154 = vpop.f32.mrf.mxu0
  %v1155 = vadd.f32 %v608, %v1154
  %1156 = vmatmul.f32.gmra.mxu0 %v1135
  %v1157 = vpop.f32.mrf.mxu0
  %v1158 = vadd.f32 %v608, %v1157
  %1159 = vdwg.mxu0
  %v1160 = vmax.f32 %v1155, 0.0
  %v1161 = vmax.f32 %v1158, 0.0
  %v1162 = vld [vmem:[%s4 + $0x208] sm:$0xff]
  %v1163 = vld [vmem:[%s4 + $0x210] sm:$0xff]
  %v1164 = vld [vmem:[%s4 + $0x218] sm:$0xff]
  %v1165 = vld [vmem:[%s4 + $0x220] sm:$0xff]
  %v1166 = vld [vmem:[%s5 + $0x7] sm:$0x1]
  %v1167 = vperm.slane %v1166, 0
  %v1169 = vsel %vm473, %v1160, 0
  %v1172 = vsel %vm473, %v1161, 0
  %1174 = vmatpush.msra.mxu0 0.0
  %1175 = vmatpush.msra.mxu0 0.0
  %1176 = vmatpush.msra.mxu0 0.0
  %1177 = vmatpush.msra.mxu0 0.0
  %1178 = vmatpush.msra.mxu0 0.0
  %1179 = vmatpush.msra.mxu0 0.0
  %1180 = vmatpush.msra.mxu0 0.0
  %1181 = vmatpush.msra.mxu0 0.0
  %1182 = vmatpush.msra.mxu0 0.0
  %1183 = vmatpush.msra.mxu0 0.0
  %1184 = vmatpush.msra.mxu0 0.0
  %1185 = vmatpush.msra.mxu0 0.0
  %1186 = vmatpush.msra.mxu0 %v1165
  %1187 = vmatpush.msra.mxu0 %v1164
  %1188 = vmatpush.msra.mxu0 %v1163
  %1189 = vmatpush.msra.mxu0 %v1162
  %1190 = vmatmul.f32.gmra.mxu0 %v1169
  %v1191 = vpop.f32.mrf.mxu0
  %v1192 = vadd.f32 %v1167, %v1191
  %1193 = vmatmul.f32.gmra.mxu0 %v1172
  %v1194 = vpop.f32.mrf.mxu0
  %v1195 = vadd.f32 %v1167, %v1194
  %1196 = vdwg.mxu0
  %v1197 = vmax.f32 %v1192, 0.0
  %v1198 = vmax.f32 %v1195, 0.0
  %v1199 = vld [vmem:[%s4 + $0x228] sm:$0xff]
  %v1200 = vld [vmem:[%s4 + $0x230] sm:$0xff]
  %v1201 = vld [vmem:[%s4 + $0x238] sm:$0xff]
  %v1202 = vld [vmem:[%s4 + $0x240] sm:$0xff]
  %v1203 = vld [vmem:[%s4 + $0x248] sm:$0xff]
  %v1204 = vld [vmem:[%s4 + $0x250] sm:$0xff]
  %v1205 = vld [vmem:[%s4 + $0x258] sm:$0xff]
  %v1206 = vld [vmem:[%s4 + $0x260] sm:$0xff]
  %v1207 = vld [vmem:[%s5 + $0x8] sm:$0x1]
  %v1208 = vperm.slane %v1207, 0
  %v1210 = vsel %vm63, %v1197, 0
  %v1213 = vsel %vm63, %v1198, 0
  %1215 = vmatpush.msra.mxu0 0.0
  %1216 = vmatpush.msra.mxu0 0.0
  %1217 = vmatpush.msra.mxu0 0.0
  %1218 = vmatpush.msra.mxu0 0.0
  %1219 = vmatpush.msra.mxu0 0.0
  %1220 = vmatpush.msra.mxu0 0.0
  %1221 = vmatpush.msra.mxu0 0.0
  %1222 = vmatpush.msra.mxu0 0.0
  %1223 = vmatpush.msra.mxu0 %v1206
  %1224 = vmatpush.msra.mxu0 %v1205
  %1225 = vmatpush.msra.mxu0 %v1204
  %1226 = vmatpush.msra.mxu0 %v1203
  %1227 = vmatpush.msra.mxu0 %v1202
  %1228 = vmatpush.msra.mxu0 %v1201
  %1229 = vmatpush.msra.mxu0 %v1200
  %1230 = vmatpush.msra.mxu0 %v1199
  %1231 = vmatmul.f32.gmra.mxu0 %v1210
  %v1232 = vpop.f32.mrf.mxu0
  %v1233 = vadd.f32 %v1208, %v1232
  %1234 = vmatmul.f32.gmra.mxu0 %v1213
  %v1235 = vpop.f32.mrf.mxu0
  %v1236 = vadd.f32 %v1208, %v1235
  %1237 = vdwg.mxu0
  %v1238 = vmax.f32 %v1233, 0.0
  %v1239 = vmax.f32 %v1236, 0.0
  %v1240 = vld [vmem:[%s4 + $0x268] sm:$0x1]
  %v1241 = vperm.slane %v1240, 0
  %v1242 = vmul.f32 %v1238, %v1241
  %v1243 = vmul.f32 %v1239, %v1241
  %v1244 = vsel %vm473, %v1242, 0.0
  %1245 = vadd.xlane.f32.xlu0 %v1244
  %v1246 = vpop.xlane.xlu0 %1245
  %v1247 = vsel %vm473, %v1243, 0.0
  %1248 = vadd.xlane.f32.xlu0 %v1247
  %v1249 = vpop.xlane.xlu0 %1248
  %v1250 = vld [vmem:[%s5 + $0x9] sm:$0x1]
  %v1251 = vperm.slane %v1250, 0
  %v1252 = vadd.f32 %v1246, %v1251
  %v1253 = vadd.f32 %v1249, %v1251
  %vm1254 = vcmask 7168
  %1255 = vst.msk [vmem:[%s6] sm:$0xff] %vm1254, %v1252
  %1256 = vst.msk [vmem:[%s6 + $0x8] sm:$0xff] %vm1254, %v1253
  // Predicated region
  $region26: #{tpu_custom_call.1} parent=0 // pred_check
    _
  $region27: #{tpu_custom_call.1} parent=0 // pred_check_branch
    %1258 = sbr.rel (0) target = $region29
  $region28: #{tpu_custom_call.1} parent=0 // pred_region
    _
  $region29: #{tpu_custom_call.1} parent=0 // pred_fallthru
    _
  // Predicated region
  $region30: #{tpu_custom_call.1} parent=0 // pred_check
    _
  $region31: #{tpu_custom_call.1} parent=0 // pred_check_branch
    %1260 = sbr.rel (0) target = $region33
  $region32: #{tpu_custom_call.1} parent=0 // pred_region
    _
  $region33: #{tpu_custom_call.1} parent=0 // pred_fallthru
    _

</llo_original>
